<compile_context>
chip_gen: v7x
topology: tpu7x:2x2x1
jax: 0.10.0
libtpu: 0.0.40
codegen_flags: <defaults>
</compile_context>

<pallas_src>
import functools

import jax
import jax.numpy as jnp
from jax import lax
from jax.experimental import pallas as pl
from jax.experimental.pallas import tpu as pltpu


def osg_decoder_kernel(x_ref, w1_ref, b1_ref, w2_ref, b2_ref, out_ref):
    # x_ref  : (P, TM, C)  VMEM tile (batch dim squeezed away by BlockSpec)
    # w1_ref : (C, H)      full
    # b1_ref : (1, H)      full
    # w2_ref : (H, O)      full
    # b2_ref : (1, O)      full
    # out_ref: (TM, O)
    xm = jnp.mean(x_ref[...], axis=0)                                   # (TM, C)
    h = jnp.dot(xm, w1_ref[...], preferred_element_type=jnp.float32)    # (TM, H)
    h = h + b1_ref[...]
    # torch.nn.Softplus(beta=1, threshold=20) forward: x if x > 20 else log1p(exp(x))
    h = jnp.where(h > 20.0, h, jnp.log1p(jnp.exp(h)))
    y = jnp.dot(h, w2_ref[...], preferred_element_type=jnp.float32)     # (TM, O)
    y = y + b2_ref[...]
    # Column 0 -> sigma (raw), columns 1: -> rgb mapping. Full-width ops + iota
    # select avoid lane-sliced concat / masked partial copies.
    scaled = jax.nn.sigmoid(y) * (1.0 + 2.0 * 0.001) - 0.001
    col = lax.broadcasted_iota(jnp.int32, y.shape, dimension=1)
    out_ref[...] = jnp.where(col == 0, y, scaled)


def _choose_tm(M, P):
    """Pick a row tile: ~4 MiB per input buffer, accounting for C lane-padding to 128."""
    lane_padded_row_bytes = P * 128 * 4          # each row costs P * 128 lanes * 4B in VMEM
    tm = (4 * 1024 * 1024) // lane_padded_row_bytes
    tm = max(256, min(tm, 4096))                 # cap for v7x (64 MiB VMEM) / megacore balance
    if tm >= M:
        return M                                 # full-extent block is always legal
    return max(8, (tm // 8) * 8)                 # sublane-align partial tiling


@functools.partial(jax.jit, static_argnames=("tm",))
def osg_decoder_forward(sampled_features, w1, b1, w2, b2, *, tm=None):
    """sampled_features: (N, P, M, C) float32. Returns dict of rgb (N,M,out), sigma (N,M,1)."""
    N, P, M, C = sampled_features.shape
    H = w1.shape[1]
    O = w2.shape[1]                              # 1 + decoder_output_dim

    tile_m = _choose_tm(M, P) if tm is None else min(int(tm), M)
    num_m = pl.cdiv(M, tile_m)                   # partial last tile masked by Pallas

    b1_2d = b1.reshape(1, H)
    b2_2d = b2.reshape(1, O)

    out = pl.pallas_call(
        osg_decoder_kernel,
        out_shape=jax.ShapeDtypeStruct((N, M, O), jnp.float32),
        grid_spec=pltpu.PrefetchScalarGridSpec(
            num_scalar_prefetch=0,
            grid=(N, num_m),
            in_specs=[
                # Native layout: squeeze batch, keep plane axis leading in the tile.
                pl.BlockSpec((pl.Squeezed(), P, tile_m, C), lambda n, i: (n, 0, i, 0)),
                pl.BlockSpec((C, H), lambda n, i: (0, 0)),
                pl.BlockSpec((1, H), lambda n, i: (0, 0)),
                pl.BlockSpec((H, O), lambda n, i: (0, 0)),
                pl.BlockSpec((1, O), lambda n, i: (0, 0)),
            ],
            out_specs=pl.BlockSpec((pl.Squeezed(), tile_m, O), lambda n, i: (n, i, 0)),
        ),
        compiler_params=pltpu.CompilerParams(
            dimension_semantics=("parallel", "parallel"),
            vmem_limit_bytes=32 * 1024 * 1024,
        ),
    )(sampled_features, w1, b1_2d, w2, b2_2d)

    sigma = out[..., 0:1]
    rgb = out[..., 1:]
    return {"rgb": rgb, "sigma": sigma}


def _init_linear(key, fan_in, fan_out):
    # Deterministic init mimicking torch.nn.Linear default: U(-1/sqrt(fan_in), 1/sqrt(fan_in))
    kw, kb = jax.random.split(key)
    bound = 1.0 / jnp.sqrt(fan_in)
    w = jax.random.uniform(kw, (fan_in, fan_out), jnp.float32, -bound, bound)
    b = jax.random.uniform(kb, (fan_out,), jnp.float32, -bound, bound)
    return w, b


def _reference(sampled_features, w1, b1, w2, b2):
    x = jnp.mean(sampled_features, axis=1)            # (N, M, C)
    N, M, C = x.shape
    x = x.reshape(N * M, C)
    h = x @ w1 + b1
    h = jnp.where(h > 20.0, h, jnp.log1p(jnp.exp(jnp.minimum(h, 20.0))))
    y = (h @ w2 + b2).reshape(N, M, -1)
    rgb = jax.nn.sigmoid(y[..., 1:]) * (1.0 + 2.0 * 0.001) - 0.001
    sigma = y[..., 0:1]
    return {"rgb": rgb, "sigma": sigma}


if __name__ == "__main__":
    key = jax.random.PRNGKey(0)
    k_x, k_x2, k_l1, k_l2 = jax.random.split(key, 4)

    # Small shapes consistent with the module: triplane features, out_dim=3 -> O=4
    N, P, M, C = 2, 3, 256, 32          # batch, planes, samples-per-batch, n_features
    hidden_dim = 64
    decoder_output_dim = 3

    sampled_features = jax.random.normal(k_x, (N, P, M, C), jnp.float32)
    w1, b1 = _init_linear(k_l1, C, hidden_dim)
    w2, b2 = _init_linear(k_l2, hidden_dim, 1 + decoder_output_dim)

    out = osg_decoder_forward(sampled_features, w1, b1, w2, b2)
    jax.block_until_ready(out)

    ref = _reference(sampled_features, w1, b1, w2, b2)
    assert out["rgb"].shape == (N, M, decoder_output_dim)
    assert out["sigma"].shape == (N, M, 1)
    assert jnp.allclose(out["rgb"], ref["rgb"], atol=1e-5, rtol=1e-5)
    assert jnp.allclose(out["sigma"], ref["sigma"], atol=1e-5, rtol=1e-5)

    # Tail-tile path: M not a multiple of tm (partial last block handled by Pallas masking).
    M2 = 200
    sf2 = jax.random.normal(k_x2, (N, P, M2, C), jnp.float32)
    out2 = osg_decoder_forward(sf2, w1, b1, w2, b2, tm=128)
    jax.block_until_ready(out2)
    ref2 = _reference(sf2, w1, b1, w2, b2)
    assert jnp.allclose(out2["rgb"], ref2["rgb"], atol=1e-5, rtol=1e-5)
    assert jnp.allclose(out2["sigma"], ref2["sigma"], atol=1e-5, rtol=1e-5)

    print("KERNEL_OK")
</pallas_src>

<mosaic_0001>
module attributes {stable_mosaic.version = 11 : i64} {
  func.func @osg_decoder_kernel(%arg0: i32, %arg1: i32, %arg2: memref<1x3x256x32xf32, #tpu.memory_space<vmem>>, %arg3: memref<32x64xf32, #tpu.memory_space<vmem>>, %arg4: memref<1x64xf32, #tpu.memory_space<vmem>>, %arg5: memref<64x4xf32, #tpu.memory_space<vmem>>, %arg6: memref<1x4xf32, #tpu.memory_space<vmem>>, %arg7: memref<1x256x4xf32, #tpu.memory_space<vmem>>) attributes {dimension_semantics = [#tpu.dimension_semantics<parallel>, #tpu.dimension_semantics<parallel>], iteration_bounds = array<i64: 2, 1>, scalar_prefetch = 0 : i64, scratch_operands = 0 : i64, tpu.core_type = #tpu.core_type<tc>, window_params = [{transform_indices = @transform_0, window_bounds = array<i64: 1, 3, 256, 32>}, {pipeline_mode = #tpu.pipeline_mode<synchronous>, transform_indices = @transform_1, window_bounds = array<i64: 32, 64>}, {pipeline_mode = #tpu.pipeline_mode<synchronous>, transform_indices = @transform_2, window_bounds = array<i64: 1, 64>}, {pipeline_mode = #tpu.pipeline_mode<synchronous>, transform_indices = @transform_3, window_bounds = array<i64: 64, 4>}, {pipeline_mode = #tpu.pipeline_mode<synchronous>, transform_indices = @transform_4, window_bounds = array<i64: 1, 4>}, {transform_indices = @transform_5, window_bounds = array<i64: 1, 256, 4>}]} {
    %c0 = arith.constant 0 : index
    %c0_0 = arith.constant 0 : index
    %c0_1 = arith.constant 0 : index
    %c0_2 = arith.constant 0 : index
    %0 = vector.load %arg2[%c0, %c0_0, %c0_1, %c0_2] : memref<1x3x256x32xf32, #tpu.memory_space<vmem>>, vector<1x3x256x32xf32>
    %1 = vector.shape_cast %0 : vector<1x3x256x32xf32> to vector<3x256x32xf32>
    %cst = arith.constant dense<0.000000e+00> : vector<256x32xf32>
    %2 = vector.multi_reduction <add>, %1, %cst [0] : vector<3x256x32xf32> to vector<256x32xf32>
    %cst_3 = arith.constant 3.000000e+00 : f32
    %3 = vector.broadcast %cst_3 : f32 to vector<256x32xf32>
    %4 = arith.divf %2, %3 : vector<256x32xf32>
    %c0_4 = arith.constant 0 : index
    %c0_5 = arith.constant 0 : index
    %5 = vector.load %arg3[%c0_4, %c0_5] : memref<32x64xf32, #tpu.memory_space<vmem>>, vector<32x64xf32>
    %cst_6 = arith.constant dense<0.000000e+00> : vector<256x64xf32>
    %6 = tpu.matmul %4, %5, %cst_6 {dimension_numbers = #tpu.dot_dimension_numbers<[1], [0], [0], [1], [0, 0, 1, 1], [], []>} : vector<256x32xf32>, vector<32x64xf32>, vector<256x64xf32> -> vector<256x64xf32>
    %c0_7 = arith.constant 0 : index
    %c0_8 = arith.constant 0 : index
    %7 = vector.load %arg4[%c0_7, %c0_8] : memref<1x64xf32, #tpu.memory_space<vmem>>, vector<1x64xf32>
    %8 = vector.broadcast %7 : vector<1x64xf32> to vector<256x64xf32>
    %9 = arith.addf %6, %8 : vector<256x64xf32>
    %cst_9 = arith.constant 2.000000e+01 : f32
    %10 = vector.broadcast %cst_9 : f32 to vector<256x64xf32>
    %11 = arith.cmpf ogt, %9, %10 : vector<256x64xf32>
    %12 = math.exp %9 : vector<256x64xf32>
    %13 = math.log1p %12 : vector<256x64xf32>
    %14 = arith.select %11, %9, %13 : vector<256x64xi1>, vector<256x64xf32>
    %c0_10 = arith.constant 0 : index
    %c0_11 = arith.constant 0 : index
    %15 = vector.load %arg5[%c0_10, %c0_11] : memref<64x4xf32, #tpu.memory_space<vmem>>, vector<64x4xf32>
    %cst_12 = arith.constant dense<0.000000e+00> : vector<256x4xf32>
    %16 = tpu.matmul %14, %15, %cst_12 {dimension_numbers = #tpu.dot_dimension_numbers<[1], [0], [0], [1], [0, 0, 1, 1], [], []>} : vector<256x64xf32>, vector<64x4xf32>, vector<256x4xf32> -> vector<256x4xf32>
    %c0_13 = arith.constant 0 : index
    %c0_14 = arith.constant 0 : index
    %17 = vector.load %arg6[%c0_13, %c0_14] : memref<1x4xf32, #tpu.memory_space<vmem>>, vector<1x4xf32>
    %18 = vector.broadcast %17 : vector<1x4xf32> to vector<256x4xf32>
    %19 = arith.addf %16, %18 : vector<256x4xf32>
    %20 = arith.negf %19 : vector<256x4xf32>
    %21 = math.exp %20 : vector<256x4xf32>
    %cst_15 = arith.constant 1.000000e+00 : f32
    %22 = vector.broadcast %cst_15 : f32 to vector<256x4xf32>
    %23 = arith.addf %22, %21 : vector<256x4xf32>
    %24 = arith.divf %22, %23 : vector<256x4xf32>
    %cst_16 = arith.constant 1.002000e+00 : f32
    %25 = vector.broadcast %cst_16 : f32 to vector<256x4xf32>
    %26 = arith.mulf %24, %25 : vector<256x4xf32>
    %cst_17 = arith.constant 1.000000e-03 : f32
    %27 = vector.broadcast %cst_17 : f32 to vector<256x4xf32>
    %28 = arith.subf %26, %27 : vector<256x4xf32>
    %29 = tpu.iota {dimensions = array<i32: 1>} : vector<256x4xi32>
    %c0_i32 = arith.constant 0 : i32
    %30 = vector.broadcast %c0_i32 : i32 to vector<256x4xi32>
    %31 = arith.cmpi eq, %29, %30 : vector<256x4xi32>
    %32 = arith.select %31, %19, %28 : vector<256x4xi1>, vector<256x4xf32>
    %c0_18 = arith.constant 0 : index
    %c0_19 = arith.constant 0 : index
    %c0_20 = arith.constant 0 : index
    %33 = vector.load %arg7[%c0_18, %c0_19, %c0_20] : memref<1x256x4xf32, #tpu.memory_space<vmem>>, vector<1x256x4xf32>
    %34 = vector.shape_cast %33 : vector<1x256x4xf32> to vector<256x4xf32>
    %35 = vector.shape_cast %32 : vector<256x4xf32> to vector<1x256x4xf32>
    tpu.vector_store %arg7[%c0_18, %c0_19, %c0_20], %35 {strides = array<i32>} : memref<1x256x4xf32, #tpu.memory_space<vmem>>, vector<1x256x4xf32>,
    return
  }
  func.func @transform_0(%arg0: i32, %arg1: i32) -> (i32, i32, i32, i32) {
    %c0_i32 = arith.constant 0 : i32
    %c0_i32_0 = arith.constant 0 : i32
    %c0_i32_1 = arith.constant 0 : i32
    return %arg0, %c0_i32, %arg1, %c0_i32_0 : i32, i32, i32, i32
  }
  func.func @transform_1(%arg0: i32, %arg1: i32) -> (i32, i32) {
    %c0_i32 = arith.constant 0 : i32
    %c0_i32_0 = arith.constant 0 : i32
    %c0_i32_1 = arith.constant 0 : i32
    return %c0_i32, %c0_i32_0 : i32, i32
  }
  func.func @transform_2(%arg0: i32, %arg1: i32) -> (i32, i32) {
    %c0_i32 = arith.constant 0 : i32
    %c0_i32_0 = arith.constant 0 : i32
    %c0_i32_1 = arith.constant 0 : i32
    return %c0_i32, %c0_i32_0 : i32, i32
  }
  func.func @transform_3(%arg0: i32, %arg1: i32) -> (i32, i32) {
    %c0_i32 = arith.constant 0 : i32
    %c0_i32_0 = arith.constant 0 : i32
    %c0_i32_1 = arith.constant 0 : i32
    return %c0_i32, %c0_i32_0 : i32, i32
  }
  func.func @transform_4(%arg0: i32, %arg1: i32) -> (i32, i32) {
    %c0_i32 = arith.constant 0 : i32
    %c0_i32_0 = arith.constant 0 : i32
    %c0_i32_1 = arith.constant 0 : i32
    return %c0_i32, %c0_i32_0 : i32, i32
  }
  func.func @transform_5(%arg0: i32, %arg1: i32) -> (i32, i32, i32) {
    %c0_i32 = arith.constant 0 : i32
    %c0_i32_0 = arith.constant 0 : i32
    return %arg0, %arg1, %c0_i32 : i32, i32, i32
  }
}

</mosaic_0001>

<llo_original>
// kernel: osg_decoder_forward.1
$region0: #{osg_decoder_forward.1}
  #allocation0 [shape = 'u32[]', space=smem, size = 0x4, offset = 0x4, fixed_abs, tag = 'smem constant byte address 0x4 - core index']
  #allocation1 [shape = 'u32[144,128]{1,0:T(1,128)}', space=vmem, size = 0x12000, scoped, tag = 'internal scratch']
  %s0 = inlined_call_operand.vmem [shape: f32[2,3,256,32], index: 0, kind: input, shape index: {}]
  %s1 = inlined_call_operand.vmem [shape: f32[32,64], index: 1, kind: input, shape index: {}]
  %s2 = inlined_call_operand.vmem [shape: f32[1,64], index: 2, kind: input, shape index: {}]
  %s3 = inlined_call_operand.vmem [shape: f32[64,4], index: 3, kind: input, shape index: {}]
  %s4 = inlined_call_operand.vmem [shape: f32[1,4], index: 4, kind: input, shape index: {}]
  %s5 = inlined_call_operand.vmem [shape: f32[2,256,4], index: 5, kind: output, shape index: {}]
  %s6 = sld [smem:[#allocation0]]
  $region53: #{osg_decoder_forward.1} parent=0
    _
  %s8 = ssub.s32 1, %s6
  %s9 = scalar_select 0, %s8, %s6
  loop: start=0, step=1, limit=4
  $region2: #{osg_decoder_forward.1} parent=0 // loop_pre_header
    _
  $region3: #{osg_decoder_forward.1} parent=0 // loop_header
    %s11 = sphi 0, %s15
    %p12 = scmp.ge.s32.totalorder %s11, 4
    %s18 = sphi 0, %s30
    %s19 = sphi 0, %s26
    %s20 = sphi 0, %s18
    %s21 = sphi 0, %s19
    %s22 = sphi 0, %s20
    %s23 = sphi 0, %s21
    %s35 = sphi 0, %s37
    %s38 = sphi 0, %s35
    %s39 = sphi 0, %s38
    %s55 = sphi 0, %s39
    %s59 = sphi 0, %s59
    %s61 = sphi 0, %s59
    %s62 = sphi 0, %s61
    %s76 = sphi 0, %s62
    %s80 = sphi 0, %s80
    %s82 = sphi 0, %s80
    %s83 = sphi 0, %s82
    %s97 = sphi 0, %s83
    %s101 = sphi 0, %s101
    %s103 = sphi 0, %s101
    %s104 = sphi 0, %s103
    %s118 = sphi 0, %s104
    %s122 = sphi 0, %s122
    %s124 = sphi 0, %s122
    %s125 = sphi 0, %s124
    %s139 = sphi 0, %s125
    %s147 = sphi 0, %s149
    %s150 = sphi 0, %s147
    %s151 = sphi 0, %s150
    %s167 = sphi 0, %s151
  $region4: #{osg_decoder_forward.1} parent=0 // loop_header_branch
    %14 = sbr.rel (%p12) target = $region8
  $region5: #{osg_decoder_forward.1} parent=0 // loop_body
    %s16 = ssub.s32 %s11, 1
    %s17 = ssub.s32 %s11, 2
    %s24 = sadd.s32 1, %s19
    %p25 = scmp.ge.s32.totalorder %s24, 1
    %s26 = scalar_select %p25, 0, %s24
    %s27 = sadd.s32 1, %s18
    %s28 = scalar_select %p25, %s27, %s18
    %p29 = scmp.ge.s32.totalorder %s28, 2
    %s30 = scalar_select %p29, 0, %s28
    %s31 = ssub.s32 %s18, %s30
    %s32 = ssub.s32 %s19, %s26
    %s33 = sor.u32 %s31, %s32
    %p34 = scmp.eq.s32.totalorder %s33, 0
    %s36 = sadd.s32 %s35, 1
    %s37 = scalar_select %p34, %s35, %s36
    %p40 = pneg %p34
    %p41 = scmp.eq.s32.totalorder %s11, 1
    %p42 = por %p40, %p41
    %p43 = scmp.ne.s32.totalorder %s35, %s38
    %p44 = scmp.eq.s32.totalorder %s11, 0
    %p45 = por %p43, %p44
    %p46 = scmp.ne.s32.totalorder %s35, %s38
    %p47 = scmp.eq.s32.totalorder %s16, 1
    %p48 = por %p46, %p47
    %p49 = scmp.ne.s32.totalorder %s38, %s39
    %p50 = scmp.eq.s32.totalorder %s16, 0
    %p51 = por %p49, %p50
    %p52 = scmp.ne.s32.totalorder %s38, %s39
    %p53 = scmp.eq.s32.totalorder %s17, 1
    %p54 = por %p52, %p53
    %p56 = scmp.ne.s32.totalorder %s39, %s55
    %p57 = scmp.eq.s32.totalorder %s17, 0
    %p58 = por %p56, %p57
    %s60 = sadd.s32 %s59, 1
    %p63 = scmp.eq.s32.totalorder %s11, 1
    %p64 = scmp.ne.s32.totalorder %s59, %s61
    %p65 = scmp.eq.s32.totalorder %s11, 0
    %p66 = por %p64, %p65
    %p67 = scmp.ne.s32.totalorder %s59, %s61
    %p68 = scmp.eq.s32.totalorder %s16, 1
    %p69 = por %p67, %p68
    %p70 = scmp.ne.s32.totalorder %s61, %s62
    %p71 = scmp.eq.s32.totalorder %s16, 0
    %p72 = por %p70, %p71
    %p73 = scmp.ne.s32.totalorder %s61, %s62
    %p74 = scmp.eq.s32.totalorder %s17, 1
    %p75 = por %p73, %p74
    %p77 = scmp.ne.s32.totalorder %s62, %s76
    %p78 = scmp.eq.s32.totalorder %s17, 0
    %p79 = por %p77, %p78
    %s81 = sadd.s32 %s80, 1
    %p84 = scmp.eq.s32.totalorder %s11, 1
    %p85 = scmp.ne.s32.totalorder %s80, %s82
    %p86 = scmp.eq.s32.totalorder %s11, 0
    %p87 = por %p85, %p86
    %p88 = scmp.ne.s32.totalorder %s80, %s82
    %p89 = scmp.eq.s32.totalorder %s16, 1
    %p90 = por %p88, %p89
    %p91 = scmp.ne.s32.totalorder %s82, %s83
    %p92 = scmp.eq.s32.totalorder %s16, 0
    %p93 = por %p91, %p92
    %p94 = scmp.ne.s32.totalorder %s82, %s83
    %p95 = scmp.eq.s32.totalorder %s17, 1
    %p96 = por %p94, %p95
    %p98 = scmp.ne.s32.totalorder %s83, %s97
    %p99 = scmp.eq.s32.totalorder %s17, 0
    %p100 = por %p98, %p99
    %s102 = sadd.s32 %s101, 1
    %p105 = scmp.eq.s32.totalorder %s11, 1
    %p106 = scmp.ne.s32.totalorder %s101, %s103
    %p107 = scmp.eq.s32.totalorder %s11, 0
    %p108 = por %p106, %p107
    %p109 = scmp.ne.s32.totalorder %s101, %s103
    %p110 = scmp.eq.s32.totalorder %s16, 1
    %p111 = por %p109, %p110
    %p112 = scmp.ne.s32.totalorder %s103, %s104
    %p113 = scmp.eq.s32.totalorder %s16, 0
    %p114 = por %p112, %p113
    %p115 = scmp.ne.s32.totalorder %s103, %s104
    %p116 = scmp.eq.s32.totalorder %s17, 1
    %p117 = por %p115, %p116
    %p119 = scmp.ne.s32.totalorder %s104, %s118
    %p120 = scmp.eq.s32.totalorder %s17, 0
    %p121 = por %p119, %p120
    %s123 = sadd.s32 %s122, 1
    %p126 = scmp.eq.s32.totalorder %s11, 1
    %p127 = scmp.ne.s32.totalorder %s122, %s124
    %p128 = scmp.eq.s32.totalorder %s11, 0
    %p129 = por %p127, %p128
    %p130 = scmp.ne.s32.totalorder %s122, %s124
    %p131 = scmp.eq.s32.totalorder %s16, 1
    %p132 = por %p130, %p131
    %p133 = scmp.ne.s32.totalorder %s124, %s125
    %p134 = scmp.eq.s32.totalorder %s16, 0
    %p135 = por %p133, %p134
    %p136 = scmp.ne.s32.totalorder %s124, %s125
    %p137 = scmp.eq.s32.totalorder %s17, 1
    %p138 = por %p136, %p137
    %p140 = scmp.ne.s32.totalorder %s125, %s139
    %p141 = scmp.eq.s32.totalorder %s17, 0
    %p142 = por %p140, %p141
    %s143 = ssub.s32 %s18, %s30
    %s144 = ssub.s32 %s19, %s26
    %s145 = sor.u32 %s143, %s144
    %p146 = scmp.eq.s32.totalorder %s145, 0
    %s148 = sadd.s32 %s147, 1
    %s149 = scalar_select %p146, %s147, %s148
    %p152 = pneg %p146
    %p153 = scmp.eq.s32.totalorder %s11, 1
    %p154 = por %p152, %p153
    %p155 = scmp.ne.s32.totalorder %s147, %s150
    %p156 = scmp.eq.s32.totalorder %s11, 0
    %p157 = por %p155, %p156
    %p158 = scmp.ne.s32.totalorder %s147, %s150
    %p159 = scmp.eq.s32.totalorder %s16, 1
    %p160 = por %p158, %p159
    %p161 = scmp.ne.s32.totalorder %s150, %s151
    %p162 = scmp.eq.s32.totalorder %s16, 0
    %p163 = por %p161, %p162
    %p164 = scmp.ne.s32.totalorder %s150, %s151
    %p165 = scmp.eq.s32.totalorder %s17, 1
    %p166 = por %p164, %p165
    %p168 = scmp.ne.s32.totalorder %s151, %s167
    %p169 = scmp.eq.s32.totalorder %s17, 0
    %p170 = por %p168, %p169
    %p171 = scmp.le.s32.totalorder 1, %s11
    %p172 = scmp.lt.s32.totalorder %s11, 3
    %p173 = pnand %p171, %p172
    %p174 = pneg %p173
    // Predicated region
    $region9: #{osg_decoder_forward.1} parent=5 // pred_check
      _
    $region10: #{osg_decoder_forward.1} parent=5 // pred_check_branch
      %176 = sbr.rel (%p173) target = $region12
    $region11: #{osg_decoder_forward.1} parent=5 // pred_region
      %s177 = ssub.s32 %s11, 1
      // Predicated region
      $region13: #{osg_decoder_forward.1} parent=11 // pred_check
        %p178 = pneg %p72
      $region14: #{osg_decoder_forward.1} parent=11 // pred_check_branch
        %180 = sbr.rel (%p178) target = $region16
      $region15: #{osg_decoder_forward.1} parent=11 // pred_region
        _
      $region16: #{osg_decoder_forward.1} parent=11 // pred_fallthru
        _
      // Predicated region
      $region17: #{osg_decoder_forward.1} parent=11 // pred_check
        %p181 = pneg %p93
      $region18: #{osg_decoder_forward.1} parent=11 // pred_check_branch
        %183 = sbr.rel (%p181) target = $region20
      $region19: #{osg_decoder_forward.1} parent=11 // pred_region
        _
      $region20: #{osg_decoder_forward.1} parent=11 // pred_fallthru
        _
      // Predicated region
      $region21: #{osg_decoder_forward.1} parent=11 // pred_check
        %p184 = pneg %p114
      $region22: #{osg_decoder_forward.1} parent=11 // pred_check_branch
        %186 = sbr.rel (%p184) target = $region24
      $region23: #{osg_decoder_forward.1} parent=11 // pred_region
        _
      $region24: #{osg_decoder_forward.1} parent=11 // pred_fallthru
        _
      // Predicated region
      $region25: #{osg_decoder_forward.1} parent=11 // pred_check
        %p187 = pneg %p135
      $region26: #{osg_decoder_forward.1} parent=11 // pred_check_branch
        %189 = sbr.rel (%p187) target = $region28
      $region27: #{osg_decoder_forward.1} parent=11 // pred_region
        _
      $region28: #{osg_decoder_forward.1} parent=11 // pred_fallthru
        _
    $region12: #{osg_decoder_forward.1} parent=5 // pred_fallthru
      _
    %p190 = scmp.lt.s32.totalorder %s11, 2
    // Predicated region
    $region29: #{osg_decoder_forward.1} parent=5 // pred_check
      %p191 = pneg %p190
    $region30: #{osg_decoder_forward.1} parent=5 // pred_check_branch
      %193 = sbr.rel (%p191) target = $region32
    $region31: #{osg_decoder_forward.1} parent=5 // pred_region
      // Predicated region
      $region33: #{osg_decoder_forward.1} parent=31 // pred_check
        %p194 = pneg %p45
      $region34: #{osg_decoder_forward.1} parent=31 // pred_check_branch
        %196 = sbr.rel (%p194) target = $region36
      $region35: #{osg_decoder_forward.1} parent=31 // pred_region
        %s197 = smul.u32 32, %s19
        %p198 = scmp.lt.s32.totalorder %s18, 1
        %s199 = scalar_select %p198, %s18, 1
        %p200 = scmp.lt.s32.totalorder %s197, 31
        %s201 = scalar_select %p200, %s197, 31
        %s202 = smul.addr %s199, 96
        %s203 = sadd.s32 %s201, %s202
        %s204 = smul.addr %s203, 8
        %s205 = scalar_lea.vmem %s0, %s204
        %s206 = smul.u32 32, %s19
      $region36: #{osg_decoder_forward.1} parent=31 // pred_fallthru
        _
    $region32: #{osg_decoder_forward.1} parent=5 // pred_fallthru
      _
    %p207 = scmp.le.s32.totalorder 1, %s11
    %p208 = scmp.lt.s32.totalorder %s11, 3
    %p209 = pnand %p207, %p208
    %p210 = pneg %p209
    // Predicated region
    $region37: #{osg_decoder_forward.1} parent=5 // pred_check
      _
    $region38: #{osg_decoder_forward.1} parent=5 // pred_check_branch
      %212 = sbr.rel (%p209) target = $region40
    $region39: #{osg_decoder_forward.1} parent=5 // pred_region
      %s213 = ssub.s32 %s11, 1
      %s214 = smul.u32 32, %s21
      %p215 = scmp.lt.s32.totalorder %s20, 1
      %s216 = scalar_select %p215, %s20, 1
      %p217 = scmp.lt.s32.totalorder %s214, 31
      %s218 = scalar_select %p217, %s214, 31
      %s219 = smul.addr %s216, 96
      %s220 = sadd.s32 %s218, %s219
      %s221 = smul.addr %s220, 8
      %s222 = scalar_lea.vmem %s0, %s221
      %p223 = pneg %p51
      %p224 = pneg %p48
      %p225 = pneg %p72
      %p226 = pneg %p69
      %p227 = pneg %p93
      %p228 = pneg %p90
      %p229 = pneg %p114
      %p230 = pneg %p111
      %p231 = pneg %p135
      %p232 = pneg %p132
      %p233 = pneg %p163
      %p234 = pneg %p160
      %s235 = smul.u32 32, %s21
      %p236 = scmp.lt.s32.totalorder %s20, 1
      %s237 = scalar_select %p236, %s20, 1
      %p238 = scmp.lt.s32.totalorder %s235, 31
      %s239 = scalar_select %p238, %s235, 31
      %s240 = smul.addr %s237, 32
      %s241 = sadd.s32 %s239, %s240
      %s242 = smul.addr %s241, 8
      %s243 = scalar_lea.vmem %s5, %s242
      %s244 = smul.u32 32, %s21
      %p245 = scmp.lt.s32.totalorder %s20, 1
      %s246 = scalar_select %p245, %s20, 1
      %p247 = scmp.lt.s32.totalorder %s244, 31
      %s248 = scalar_select %p247, %s244, 31
      %s249 = smul.addr %s246, 96
      %s250 = sadd.s32 %s248, %s249
      %s251 = smul.addr %s250, 8
      %s252 = scalar_lea.vmem %s0, %s251
      %s253 = smul.u32 32, %s21
      %s254 = smul.u32 32, %s21
      %p255 = scmp.lt.s32.totalorder %s20, 1
      %s256 = scalar_select %p255, %s20, 1
      %p257 = scmp.lt.s32.totalorder %s254, 31
      %s258 = scalar_select %p257, %s254, 31
      %s259 = smul.addr %s256, 32
      %s260 = sadd.s32 %s258, %s259
      %s261 = smul.addr %s260, 8
      %s262 = scalar_lea.vmem %s5, %s261
      %s263 = smul.u32 32, %s21
      %v264 = vld [vmem:[%s252] sm:$0xff]
      %v265 = vld [vmem:[%s252 + $0x8] sm:$0xff]
      %v266 = vld [vmem:[%s252 + $0x10] sm:$0xff]
      %v267 = vld [vmem:[%s252 + $0x18] sm:$0xff]
      %v268 = vld [vmem:[%s252 + $0x20] sm:$0xff]
      %v269 = vld [vmem:[%s252 + $0x28] sm:$0xff]
      %v270 = vld [vmem:[%s252 + $0x30] sm:$0xff]
      %v271 = vld [vmem:[%s252 + $0x38] sm:$0xff]
      %v272 = vld [vmem:[%s252 + $0x40] sm:$0xff]
      %v273 = vld [vmem:[%s252 + $0x48] sm:$0xff]
      %v274 = vld [vmem:[%s252 + $0x50] sm:$0xff]
      %v275 = vld [vmem:[%s252 + $0x58] sm:$0xff]
      %v276 = vld [vmem:[%s252 + $0x60] sm:$0xff]
      %v277 = vld [vmem:[%s252 + $0x68] sm:$0xff]
      %v278 = vld [vmem:[%s252 + $0x70] sm:$0xff]
      %v279 = vld [vmem:[%s252 + $0x78] sm:$0xff]
      %v280 = vld [vmem:[%s252 + $0x80] sm:$0xff]
      %v281 = vld [vmem:[%s252 + $0x88] sm:$0xff]
      %v282 = vld [vmem:[%s252 + $0x90] sm:$0xff]
      %v283 = vld [vmem:[%s252 + $0x98] sm:$0xff]
      %v284 = vld [vmem:[%s252 + $0xa0] sm:$0xff]
      %v285 = vld [vmem:[%s252 + $0xa8] sm:$0xff]
      %v286 = vld [vmem:[%s252 + $0xb0] sm:$0xff]
      %v287 = vld [vmem:[%s252 + $0xb8] sm:$0xff]
      %v288 = vld [vmem:[%s252 + $0xc0] sm:$0xff]
      %v289 = vld [vmem:[%s252 + $0xc8] sm:$0xff]
      %v290 = vld [vmem:[%s252 + $0xd0] sm:$0xff]
      %v291 = vld [vmem:[%s252 + $0xd8] sm:$0xff]
      %v292 = vld [vmem:[%s252 + $0xe0] sm:$0xff]
      %v293 = vld [vmem:[%s252 + $0xe8] sm:$0xff]
      %v294 = vld [vmem:[%s252 + $0xf0] sm:$0xff]
      %v295 = vld [vmem:[%s252 + $0xf8] sm:$0xff]
      %v296 = vld [vmem:[%s252 + $0x100] sm:$0xff]
      %v297 = vld [vmem:[%s252 + $0x108] sm:$0xff]
      %v298 = vld [vmem:[%s252 + $0x110] sm:$0xff]
      %v299 = vld [vmem:[%s252 + $0x118] sm:$0xff]
      %v300 = vld [vmem:[%s252 + $0x120] sm:$0xff]
      %v301 = vld [vmem:[%s252 + $0x128] sm:$0xff]
      %v302 = vld [vmem:[%s252 + $0x130] sm:$0xff]
      %v303 = vld [vmem:[%s252 + $0x138] sm:$0xff]
      %v304 = vld [vmem:[%s252 + $0x140] sm:$0xff]
      %v305 = vld [vmem:[%s252 + $0x148] sm:$0xff]
      %v306 = vld [vmem:[%s252 + $0x150] sm:$0xff]
      %v307 = vld [vmem:[%s252 + $0x158] sm:$0xff]
      %v308 = vld [vmem:[%s252 + $0x160] sm:$0xff]
      %v309 = vld [vmem:[%s252 + $0x168] sm:$0xff]
      %v310 = vld [vmem:[%s252 + $0x170] sm:$0xff]
      %v311 = vld [vmem:[%s252 + $0x178] sm:$0xff]
      %v312 = vld [vmem:[%s252 + $0x180] sm:$0xff]
      %v313 = vld [vmem:[%s252 + $0x188] sm:$0xff]
      %v314 = vld [vmem:[%s252 + $0x190] sm:$0xff]
      %v315 = vld [vmem:[%s252 + $0x198] sm:$0xff]
      %v316 = vld [vmem:[%s252 + $0x1a0] sm:$0xff]
      %v317 = vld [vmem:[%s252 + $0x1a8] sm:$0xff]
      %v318 = vld [vmem:[%s252 + $0x1b0] sm:$0xff]
      %v319 = vld [vmem:[%s252 + $0x1b8] sm:$0xff]
      %v320 = vld [vmem:[%s252 + $0x1c0] sm:$0xff]
      %v321 = vld [vmem:[%s252 + $0x1c8] sm:$0xff]
      %v322 = vld [vmem:[%s252 + $0x1d0] sm:$0xff]
      %v323 = vld [vmem:[%s252 + $0x1d8] sm:$0xff]
      %v324 = vld [vmem:[%s252 + $0x1e0] sm:$0xff]
      %v325 = vld [vmem:[%s252 + $0x1e8] sm:$0xff]
      %v326 = vld [vmem:[%s252 + $0x1f0] sm:$0xff]
      %v327 = vld [vmem:[%s252 + $0x1f8] sm:$0xff]
      %v328 = vld [vmem:[%s252 + $0x200] sm:$0xff]
      %v329 = vld [vmem:[%s252 + $0x208] sm:$0xff]
      %v330 = vld [vmem:[%s252 + $0x210] sm:$0xff]
      %v331 = vld [vmem:[%s252 + $0x218] sm:$0xff]
      %v332 = vld [vmem:[%s252 + $0x220] sm:$0xff]
      %v333 = vld [vmem:[%s252 + $0x228] sm:$0xff]
      %v334 = vld [vmem:[%s252 + $0x230] sm:$0xff]
      %v335 = vld [vmem:[%s252 + $0x238] sm:$0xff]
      %v336 = vld [vmem:[%s252 + $0x240] sm:$0xff]
      %v337 = vld [vmem:[%s252 + $0x248] sm:$0xff]
      %v338 = vld [vmem:[%s252 + $0x250] sm:$0xff]
      %v339 = vld [vmem:[%s252 + $0x258] sm:$0xff]
      %v340 = vld [vmem:[%s252 + $0x260] sm:$0xff]
      %v341 = vld [vmem:[%s252 + $0x268] sm:$0xff]
      %v342 = vld [vmem:[%s252 + $0x270] sm:$0xff]
      %v343 = vld [vmem:[%s252 + $0x278] sm:$0xff]
      %v344 = vld [vmem:[%s252 + $0x280] sm:$0xff]
      %v345 = vld [vmem:[%s252 + $0x288] sm:$0xff]
      %v346 = vld [vmem:[%s252 + $0x290] sm:$0xff]
      %v347 = vld [vmem:[%s252 + $0x298] sm:$0xff]
      %v348 = vld [vmem:[%s252 + $0x2a0] sm:$0xff]
      %v349 = vld [vmem:[%s252 + $0x2a8] sm:$0xff]
      %v350 = vld [vmem:[%s252 + $0x2b0] sm:$0xff]
      %v351 = vld [vmem:[%s252 + $0x2b8] sm:$0xff]
      %v352 = vld [vmem:[%s252 + $0x2c0] sm:$0xff]
      %v353 = vld [vmem:[%s252 + $0x2c8] sm:$0xff]
      %v354 = vld [vmem:[%s252 + $0x2d0] sm:$0xff]
      %v355 = vld [vmem:[%s252 + $0x2d8] sm:$0xff]
      %v356 = vld [vmem:[%s252 + $0x2e0] sm:$0xff]
      %v357 = vld [vmem:[%s252 + $0x2e8] sm:$0xff]
      %v358 = vld [vmem:[%s252 + $0x2f0] sm:$0xff]
      %v359 = vld [vmem:[%s252 + $0x2f8] sm:$0xff]
      %vm360 = vcmask 261120
      %v361 = vsel %vm360, %v264, 0.0
      %v362 = vsel %vm360, %v296, 0.0
      %v363 = vadd.f32 %v361, %v362
      %v364 = vsel %vm360, %v328, 0.0
      %v365 = vadd.f32 %v363, %v364
      %v366 = vsel %vm360, %v265, 0.0
      %v367 = vsel %vm360, %v297, 0.0
      %v368 = vadd.f32 %v366, %v367
      %v369 = vsel %vm360, %v329, 0.0
      %v370 = vadd.f32 %v368, %v369
      %v371 = vsel %vm360, %v266, 0.0
      %v372 = vsel %vm360, %v298, 0.0
      %v373 = vadd.f32 %v371, %v372
      %v374 = vsel %vm360, %v330, 0.0
      %v375 = vadd.f32 %v373, %v374
      %v376 = vsel %vm360, %v267, 0.0
      %v377 = vsel %vm360, %v299, 0.0
      %v378 = vadd.f32 %v376, %v377
      %v379 = vsel %vm360, %v331, 0.0
      %v380 = vadd.f32 %v378, %v379
      %v381 = vsel %vm360, %v268, 0.0
      %v382 = vsel %vm360, %v300, 0.0
      %v383 = vadd.f32 %v381, %v382
      %v384 = vsel %vm360, %v332, 0.0
      %v385 = vadd.f32 %v383, %v384
      %v386 = vsel %vm360, %v269, 0.0
      %v387 = vsel %vm360, %v301, 0.0
      %v388 = vadd.f32 %v386, %v387
      %v389 = vsel %vm360, %v333, 0.0
      %v390 = vadd.f32 %v388, %v389
      %v391 = vsel %vm360, %v270, 0.0
      %v392 = vsel %vm360, %v302, 0.0
      %v393 = vadd.f32 %v391, %v392
      %v394 = vsel %vm360, %v334, 0.0
      %v395 = vadd.f32 %v393, %v394
      %v396 = vsel %vm360, %v271, 0.0
      %v397 = vsel %vm360, %v303, 0.0
      %v398 = vadd.f32 %v396, %v397
      %v399 = vsel %vm360, %v335, 0.0
      %v400 = vadd.f32 %v398, %v399
      %v401 = vsel %vm360, %v272, 0.0
      %v402 = vsel %vm360, %v304, 0.0
      %v403 = vadd.f32 %v401, %v402
      %v404 = vsel %vm360, %v336, 0.0
      %v405 = vadd.f32 %v403, %v404
      %v406 = vsel %vm360, %v273, 0.0
      %v407 = vsel %vm360, %v305, 0.0
      %v408 = vadd.f32 %v406, %v407
      %v409 = vsel %vm360, %v337, 0.0
      %v410 = vadd.f32 %v408, %v409
      %v411 = vsel %vm360, %v274, 0.0
      %v412 = vsel %vm360, %v306, 0.0
      %v413 = vadd.f32 %v411, %v412
      %v414 = vsel %vm360, %v338, 0.0
      %v415 = vadd.f32 %v413, %v414
      %v416 = vsel %vm360, %v275, 0.0
      %v417 = vsel %vm360, %v307, 0.0
      %v418 = vadd.f32 %v416, %v417
      %v419 = vsel %vm360, %v339, 0.0
      %v420 = vadd.f32 %v418, %v419
      %v421 = vsel %vm360, %v276, 0.0
      %v422 = vsel %vm360, %v308, 0.0
      %v423 = vadd.f32 %v421, %v422
      %v424 = vsel %vm360, %v340, 0.0
      %v425 = vadd.f32 %v423, %v424
      %v426 = vsel %vm360, %v277, 0.0
      %v427 = vsel %vm360, %v309, 0.0
      %v428 = vadd.f32 %v426, %v427
      %v429 = vsel %vm360, %v341, 0.0
      %v430 = vadd.f32 %v428, %v429
      %v431 = vsel %vm360, %v278, 0.0
      %v432 = vsel %vm360, %v310, 0.0
      %v433 = vadd.f32 %v431, %v432
      %v434 = vsel %vm360, %v342, 0.0
      %v435 = vadd.f32 %v433, %v434
      %v436 = vsel %vm360, %v279, 0.0
      %v437 = vsel %vm360, %v311, 0.0
      %v438 = vadd.f32 %v436, %v437
      %v439 = vsel %vm360, %v343, 0.0
      %v440 = vadd.f32 %v438, %v439
      %v441 = vsel %vm360, %v280, 0.0
      %v442 = vsel %vm360, %v312, 0.0
      %v443 = vadd.f32 %v441, %v442
      %v444 = vsel %vm360, %v344, 0.0
      %v445 = vadd.f32 %v443, %v444
      %v446 = vsel %vm360, %v281, 0.0
      %v447 = vsel %vm360, %v313, 0.0
      %v448 = vadd.f32 %v446, %v447
      %v449 = vsel %vm360, %v345, 0.0
      %v450 = vadd.f32 %v448, %v449
      %v451 = vsel %vm360, %v282, 0.0
      %v452 = vsel %vm360, %v314, 0.0
      %v453 = vadd.f32 %v451, %v452
      %v454 = vsel %vm360, %v346, 0.0
      %v455 = vadd.f32 %v453, %v454
      %v456 = vsel %vm360, %v283, 0.0
      %v457 = vsel %vm360, %v315, 0.0
      %v458 = vadd.f32 %v456, %v457
      %v459 = vsel %vm360, %v347, 0.0
      %v460 = vadd.f32 %v458, %v459
      %v461 = vsel %vm360, %v284, 0.0
      %v462 = vsel %vm360, %v316, 0.0
      %v463 = vadd.f32 %v461, %v462
      %v464 = vsel %vm360, %v348, 0.0
      %v465 = vadd.f32 %v463, %v464
      %v466 = vsel %vm360, %v285, 0.0
      %v467 = vsel %vm360, %v317, 0.0
      %v468 = vadd.f32 %v466, %v467
      %v469 = vsel %vm360, %v349, 0.0
      %v470 = vadd.f32 %v468, %v469
      %v471 = vsel %vm360, %v286, 0.0
      %v472 = vsel %vm360, %v318, 0.0
      %v473 = vadd.f32 %v471, %v472
      %v474 = vsel %vm360, %v350, 0.0
      %v475 = vadd.f32 %v473, %v474
      %v476 = vsel %vm360, %v287, 0.0
      %v477 = vsel %vm360, %v319, 0.0
      %v478 = vadd.f32 %v476, %v477
      %v479 = vsel %vm360, %v351, 0.0
      %v480 = vadd.f32 %v478, %v479
      %v481 = vsel %vm360, %v288, 0.0
      %v482 = vsel %vm360, %v320, 0.0
      %v483 = vadd.f32 %v481, %v482
      %v484 = vsel %vm360, %v352, 0.0
      %v485 = vadd.f32 %v483, %v484
      %v486 = vsel %vm360, %v289, 0.0
      %v487 = vsel %vm360, %v321, 0.0
      %v488 = vadd.f32 %v486, %v487
      %v489 = vsel %vm360, %v353, 0.0
      %v490 = vadd.f32 %v488, %v489
      %v491 = vsel %vm360, %v290, 0.0
      %v492 = vsel %vm360, %v322, 0.0
      %v493 = vadd.f32 %v491, %v492
      %v494 = vsel %vm360, %v354, 0.0
      %v495 = vadd.f32 %v493, %v494
      %v496 = vsel %vm360, %v291, 0.0
      %v497 = vsel %vm360, %v323, 0.0
      %v498 = vadd.f32 %v496, %v497
      %v499 = vsel %vm360, %v355, 0.0
      %v500 = vadd.f32 %v498, %v499
      %v501 = vsel %vm360, %v292, 0.0
      %v502 = vsel %vm360, %v324, 0.0
      %v503 = vadd.f32 %v501, %v502
      %v504 = vsel %vm360, %v356, 0.0
      %v505 = vadd.f32 %v503, %v504
      %v506 = vsel %vm360, %v293, 0.0
      %v507 = vsel %vm360, %v325, 0.0
      %v508 = vadd.f32 %v506, %v507
      %v509 = vsel %vm360, %v357, 0.0
      %v510 = vadd.f32 %v508, %v509
      %v511 = vsel %vm360, %v294, 0.0
      %v512 = vsel %vm360, %v326, 0.0
      %v513 = vadd.f32 %v511, %v512
      %v514 = vsel %vm360, %v358, 0.0
      %v515 = vadd.f32 %v513, %v514
      %v516 = vsel %vm360, %v295, 0.0
      %v517 = vsel %vm360, %v327, 0.0
      %v518 = vadd.f32 %v516, %v517
      %v519 = vsel %vm360, %v359, 0.0
      %v520 = vadd.f32 %v518, %v519
      %v521 = vrcp.pop 3.0
      %v522 = vmul.f32 %v365, %v521
      %v523 = vmul.f32 %v370, %v521
      %v524 = vmul.f32 %v375, %v521
      %v525 = vmul.f32 %v380, %v521
      %v526 = vmul.f32 %v385, %v521
      %v527 = vmul.f32 %v390, %v521
      %v528 = vmul.f32 %v395, %v521
      %v529 = vmul.f32 %v400, %v521
      %v530 = vmul.f32 %v405, %v521
      %v531 = vmul.f32 %v410, %v521
      %v532 = vmul.f32 %v415, %v521
      %v533 = vmul.f32 %v420, %v521
      %v534 = vmul.f32 %v425, %v521
      %v535 = vmul.f32 %v430, %v521
      %v536 = vmul.f32 %v435, %v521
      %v537 = vmul.f32 %v440, %v521
      %v538 = vmul.f32 %v445, %v521
      %v539 = vmul.f32 %v450, %v521
      %v540 = vmul.f32 %v455, %v521
      %v541 = vmul.f32 %v460, %v521
      %v542 = vmul.f32 %v465, %v521
      %v543 = vmul.f32 %v470, %v521
      %v544 = vmul.f32 %v475, %v521
      %v545 = vmul.f32 %v480, %v521
      %v546 = vmul.f32 %v485, %v521
      %v547 = vmul.f32 %v490, %v521
      %v548 = vmul.f32 %v495, %v521
      %v549 = vmul.f32 %v500, %v521
      %v550 = vmul.f32 %v505, %v521
      %v551 = vmul.f32 %v510, %v521
      %v552 = vmul.f32 %v515, %v521
      %v553 = vmul.f32 %v520, %v521
      %v554 = vld [vmem:[%s1] sm:$0xff]
      %v555 = vld [vmem:[%s1 + $0x8] sm:$0xff]
      %v556 = vld [vmem:[%s1 + $0x10] sm:$0xff]
      %v557 = vld [vmem:[%s1 + $0x18] sm:$0xff]
      %v558 = vld [vmem:[%s2] sm:$0x1]
      %v560 = vlaneseq
      %v561 = vshrl.u32 %v560, 7
      %v562 = vsub.s32 0, %v561
      %v563 = vrot.slane %v558, %v562
      %v566 = vsel %vm360, %v522, 0
      %v569 = vsel %vm360, %v523, 0
      %v572 = vsel %vm360, %v524, 0
      %v575 = vsel %vm360, %v525, 0
      %v578 = vsel %vm360, %v526, 0
      %v581 = vsel %vm360, %v527, 0
      %v584 = vsel %vm360, %v528, 0
      %v587 = vsel %vm360, %v529, 0
      %v590 = vsel %vm360, %v530, 0
      %v593 = vsel %vm360, %v531, 0
      %v596 = vsel %vm360, %v532, 0
      %v599 = vsel %vm360, %v533, 0
      %v602 = vsel %vm360, %v534, 0
      %v605 = vsel %vm360, %v535, 0
      %v608 = vsel %vm360, %v536, 0
      %v611 = vsel %vm360, %v537, 0
      %v614 = vsel %vm360, %v538, 0
      %v617 = vsel %vm360, %v539, 0
      %v620 = vsel %vm360, %v540, 0
      %v623 = vsel %vm360, %v541, 0
      %v626 = vsel %vm360, %v542, 0
      %v629 = vsel %vm360, %v543, 0
      %v632 = vsel %vm360, %v544, 0
      %v635 = vsel %vm360, %v545, 0
      %v638 = vsel %vm360, %v546, 0
      %v641 = vsel %vm360, %v547, 0
      %v644 = vsel %vm360, %v548, 0
      %v647 = vsel %vm360, %v549, 0
      %v650 = vsel %vm360, %v550, 0
      %v653 = vsel %vm360, %v551, 0
      %v656 = vsel %vm360, %v552, 0
      %v659 = vsel %vm360, %v553, 0
      %661 = vmatprep.subr.mxu0 0.0
      %662 = vmatpush1.msra.mxu0 %v554
      %663 = vmatprep.subr.mxu0 0.0
      %664 = vmatpush1.msra.mxu0 %v555
      %665 = vmatprep.subr.mxu0 0.0
      %666 = vmatpush1.msra.mxu0 %v556
      %667 = vmatprep.subr.mxu0 0.0
      %668 = vmatpush1.msra.mxu0 %v557
      %669 = vmatprep.subr.mxu0 0.0
      %670 = vmatpush1.msra.mxu0 0.0
      %671 = vmatprep.subr.mxu0 0.0
      %672 = vmatpush1.msra.mxu0 0.0
      %673 = vmatprep.subr.mxu0 0.0
      %674 = vmatpush1.msra.mxu0 0.0
      %675 = vmatprep.subr.mxu0 0.0
      %676 = vmatpush1.msra.mxu0 0.0
      %677 = vmatprep.subr.mxu0 0.0
      %678 = vmatpush1.msra.mxu0 0.0
      %679 = vmatprep.subr.mxu0 0.0
      %680 = vmatpush1.msra.mxu0 0.0
      %681 = vmatprep.subr.mxu0 0.0
      %682 = vmatpush1.msra.mxu0 0.0
      %683 = vmatprep.subr.mxu0 0.0
      %684 = vmatpush1.msra.mxu0 0.0
      %685 = vmatprep.subr.mxu0 0.0
      %686 = vmatpush1.msra.mxu0 0.0
      %687 = vmatprep.subr.mxu0 0.0
      %688 = vmatpush1.msra.mxu0 0.0
      %689 = vmatprep.subr.mxu0 0.0
      %690 = vmatpush1.msra.mxu0 0.0
      %691 = vmatprep.subr.mxu0 0.0
      %692 = vmatpush1.msra.mxu0 0.0
      %693 = vmatprep.subr.mxu0 0.0
      %694 = vmatpush1.msra.mxu0 0.0
      %695 = vmatprep.subr.mxu0 0.0
      %696 = vmatpush1.msra.mxu0 0.0
      %697 = vmatprep.subr.mxu0 0.0
      %698 = vmatpush1.msra.mxu0 0.0
      %699 = vmatprep.subr.mxu0 0.0
      %700 = vmatpush1.msra.mxu0 0.0
      %701 = vmatprep.subr.mxu0 0.0
      %702 = vmatpush1.msra.mxu0 0.0
      %703 = vmatprep.subr.mxu0 0.0
      %704 = vmatpush1.msra.mxu0 0.0
      %705 = vmatprep.subr.mxu0 0.0
      %706 = vmatpush1.msra.mxu0 0.0
      %707 = vmatprep.subr.mxu0 0.0
      %708 = vmatpush1.msra.mxu0 0.0
      %709 = vmatprep.subr.mxu0 0.0
      %710 = vmatpush1.msra.mxu0 0.0
      %711 = vmatprep.subr.mxu0 0.0
      %712 = vmatpush1.msra.mxu0 0.0
      %713 = vmatprep.subr.mxu0 0.0
      %714 = vmatpush1.msra.mxu0 0.0
      %715 = vmatprep.subr.mxu0 0.0
      %716 = vmatpush1.msra.mxu0 0.0
      %717 = vmatprep.subr.mxu0 0.0
      %718 = vmatpush1.msra.mxu0 0.0
      %719 = vmatprep.subr.mxu0 0.0
      %720 = vmatpush1.msra.mxu0 0.0
      %721 = vmatprep.subr.mxu0 0.0
      %722 = vmatpush1.msra.mxu0 0.0
      %723 = vmatprep.subr.mxu0 0.0
      %724 = vmatpush1.msra.mxu0 0.0
      %725 = vmatprep.mubr.f32.mxu0 0.0
      %726 = vmatmul.mubr.f32.gmra.mrb[0].mxu0 %v566
      %v727 = vpop.f32.mrb[0].mxu0
      %v728 = vadd.f32 %v563, %v727
      %v729 = vpop.f32.mrb[0].mxu0
      %730 = vmatprep.mubr.f32.mxu0 0.0
      %731 = vmatmul.mubr.f32.gmra.mrb[0].mxu0 %v569
      %v732 = vpop.f32.mrb[0].mxu0
      %v733 = vadd.f32 %v563, %v732
      %v734 = vpop.f32.mrb[0].mxu0
      %735 = vmatprep.mubr.f32.mxu0 0.0
      %736 = vmatmul.mubr.f32.gmra.mrb[0].mxu0 %v572
      %v737 = vpop.f32.mrb[0].mxu0
      %v738 = vadd.f32 %v563, %v737
      %v739 = vpop.f32.mrb[0].mxu0
      %740 = vmatprep.mubr.f32.mxu0 0.0
      %741 = vmatmul.mubr.f32.gmra.mrb[0].mxu0 %v575
      %v742 = vpop.f32.mrb[0].mxu0
      %v743 = vadd.f32 %v563, %v742
      %v744 = vpop.f32.mrb[0].mxu0
      %745 = vmatprep.mubr.f32.mxu0 0.0
      %746 = vmatmul.mubr.f32.gmra.mrb[0].mxu0 %v578
      %v747 = vpop.f32.mrb[0].mxu0
      %v748 = vadd.f32 %v563, %v747
      %v749 = vpop.f32.mrb[0].mxu0
      %750 = vmatprep.mubr.f32.mxu0 0.0
      %751 = vmatmul.mubr.f32.gmra.mrb[0].mxu0 %v581
      %v752 = vpop.f32.mrb[0].mxu0
      %v753 = vadd.f32 %v563, %v752
      %v754 = vpop.f32.mrb[0].mxu0
      %755 = vmatprep.mubr.f32.mxu0 0.0
      %756 = vmatmul.mubr.f32.gmra.mrb[0].mxu0 %v584
      %v757 = vpop.f32.mrb[0].mxu0
      %v758 = vadd.f32 %v563, %v757
      %v759 = vpop.f32.mrb[0].mxu0
      %760 = vmatprep.mubr.f32.mxu0 0.0
      %761 = vmatmul.mubr.f32.gmra.mrb[0].mxu0 %v587
      %v762 = vpop.f32.mrb[0].mxu0
      %v763 = vadd.f32 %v563, %v762
      %v764 = vpop.f32.mrb[0].mxu0
      %765 = vmatprep.mubr.f32.mxu0 0.0
      %766 = vmatmul.mubr.f32.gmra.mrb[0].mxu0 %v590
      %v767 = vpop.f32.mrb[0].mxu0
      %v768 = vadd.f32 %v563, %v767
      %v769 = vpop.f32.mrb[0].mxu0
      %770 = vmatprep.mubr.f32.mxu0 0.0
      %771 = vmatmul.mubr.f32.gmra.mrb[0].mxu0 %v593
      %v772 = vpop.f32.mrb[0].mxu0
      %v773 = vadd.f32 %v563, %v772
      %v774 = vpop.f32.mrb[0].mxu0
      %775 = vmatprep.mubr.f32.mxu0 0.0
      %776 = vmatmul.mubr.f32.gmra.mrb[0].mxu0 %v596
      %v777 = vpop.f32.mrb[0].mxu0
      %v778 = vadd.f32 %v563, %v777
      %v779 = vpop.f32.mrb[0].mxu0
      %780 = vmatprep.mubr.f32.mxu0 0.0
      %781 = vmatmul.mubr.f32.gmra.mrb[0].mxu0 %v599
      %v782 = vpop.f32.mrb[0].mxu0
      %v783 = vadd.f32 %v563, %v782
      %v784 = vpop.f32.mrb[0].mxu0
      %785 = vmatprep.mubr.f32.mxu0 0.0
      %786 = vmatmul.mubr.f32.gmra.mrb[0].mxu0 %v602
      %v787 = vpop.f32.mrb[0].mxu0
      %v788 = vadd.f32 %v563, %v787
      %v789 = vpop.f32.mrb[0].mxu0
      %790 = vmatprep.mubr.f32.mxu0 0.0
      %791 = vmatmul.mubr.f32.gmra.mrb[0].mxu0 %v605
      %v792 = vpop.f32.mrb[0].mxu0
      %v793 = vadd.f32 %v563, %v792
      %v794 = vpop.f32.mrb[0].mxu0
      %795 = vmatprep.mubr.f32.mxu0 0.0
      %796 = vmatmul.mubr.f32.gmra.mrb[0].mxu0 %v608
      %v797 = vpop.f32.mrb[0].mxu0
      %v798 = vadd.f32 %v563, %v797
      %v799 = vpop.f32.mrb[0].mxu0
      %800 = vmatprep.mubr.f32.mxu0 0.0
      %801 = vmatmul.mubr.f32.gmra.mrb[0].mxu0 %v611
      %v802 = vpop.f32.mrb[0].mxu0
      %v803 = vadd.f32 %v563, %v802
      %v804 = vpop.f32.mrb[0].mxu0
      %805 = vmatprep.mubr.f32.mxu0 0.0
      %806 = vmatmul.mubr.f32.gmra.mrb[0].mxu0 %v614
      %v807 = vpop.f32.mrb[0].mxu0
      %v808 = vadd.f32 %v563, %v807
      %v809 = vpop.f32.mrb[0].mxu0
      %810 = vmatprep.mubr.f32.mxu0 0.0
      %811 = vmatmul.mubr.f32.gmra.mrb[0].mxu0 %v617
      %v812 = vpop.f32.mrb[0].mxu0
      %v813 = vadd.f32 %v563, %v812
      %v814 = vpop.f32.mrb[0].mxu0
      %815 = vmatprep.mubr.f32.mxu0 0.0
      %816 = vmatmul.mubr.f32.gmra.mrb[0].mxu0 %v620
      %v817 = vpop.f32.mrb[0].mxu0
      %v818 = vadd.f32 %v563, %v817
      %v819 = vpop.f32.mrb[0].mxu0
      %820 = vmatprep.mubr.f32.mxu0 0.0
      %821 = vmatmul.mubr.f32.gmra.mrb[0].mxu0 %v623
      %v822 = vpop.f32.mrb[0].mxu0
      %v823 = vadd.f32 %v563, %v822
      %v824 = vpop.f32.mrb[0].mxu0
      %825 = vmatprep.mubr.f32.mxu0 0.0
      %826 = vmatmul.mubr.f32.gmra.mrb[0].mxu0 %v626
      %v827 = vpop.f32.mrb[0].mxu0
      %v828 = vadd.f32 %v563, %v827
      %v829 = vpop.f32.mrb[0].mxu0
      %830 = vmatprep.mubr.f32.mxu0 0.0
      %831 = vmatmul.mubr.f32.gmra.mrb[0].mxu0 %v629
      %v832 = vpop.f32.mrb[0].mxu0
      %v833 = vadd.f32 %v563, %v832
      %v834 = vpop.f32.mrb[0].mxu0
      %835 = vmatprep.mubr.f32.mxu0 0.0
      %836 = vmatmul.mubr.f32.gmra.mrb[0].mxu0 %v632
      %v837 = vpop.f32.mrb[0].mxu0
      %v838 = vadd.f32 %v563, %v837
      %v839 = vpop.f32.mrb[0].mxu0
      %840 = vmatprep.mubr.f32.mxu0 0.0
      %841 = vmatmul.mubr.f32.gmra.mrb[0].mxu0 %v635
      %v842 = vpop.f32.mrb[0].mxu0
      %v843 = vadd.f32 %v563, %v842
      %v844 = vpop.f32.mrb[0].mxu0
      %845 = vmatprep.mubr.f32.mxu0 0.0
      %846 = vmatmul.mubr.f32.gmra.mrb[0].mxu0 %v638
      %v847 = vpop.f32.mrb[0].mxu0
      %v848 = vadd.f32 %v563, %v847
      %v849 = vpop.f32.mrb[0].mxu0
      %850 = vmatprep.mubr.f32.mxu0 0.0
      %851 = vmatmul.mubr.f32.gmra.mrb[0].mxu0 %v641
      %v852 = vpop.f32.mrb[0].mxu0
      %v853 = vadd.f32 %v563, %v852
      %v854 = vpop.f32.mrb[0].mxu0
      %855 = vmatprep.mubr.f32.mxu0 0.0
      %856 = vmatmul.mubr.f32.gmra.mrb[0].mxu0 %v644
      %v857 = vpop.f32.mrb[0].mxu0
      %v858 = vadd.f32 %v563, %v857
      %v859 = vpop.f32.mrb[0].mxu0
      %860 = vmatprep.mubr.f32.mxu0 0.0
      %861 = vmatmul.mubr.f32.gmra.mrb[0].mxu0 %v647
      %v862 = vpop.f32.mrb[0].mxu0
      %v863 = vadd.f32 %v563, %v862
      %v864 = vpop.f32.mrb[0].mxu0
      %865 = vmatprep.mubr.f32.mxu0 0.0
      %866 = vmatmul.mubr.f32.gmra.mrb[0].mxu0 %v650
      %v867 = vpop.f32.mrb[0].mxu0
      %v868 = vadd.f32 %v563, %v867
      %v869 = vpop.f32.mrb[0].mxu0
      %870 = vmatprep.mubr.f32.mxu0 0.0
      %871 = vmatmul.mubr.f32.gmra.mrb[0].mxu0 %v653
      %v872 = vpop.f32.mrb[0].mxu0
      %v873 = vadd.f32 %v563, %v872
      %v874 = vpop.f32.mrb[0].mxu0
      %875 = vmatprep.mubr.f32.mxu0 0.0
      %876 = vmatmul.mubr.f32.gmra.mrb[0].mxu0 %v656
      %v877 = vpop.f32.mrb[0].mxu0
      %v878 = vadd.f32 %v563, %v877
      %v879 = vpop.f32.mrb[0].mxu0
      %880 = vmatprep.mubr.f32.mxu0 0.0
      %881 = vmatmul.mubr.f32.gmra.mrb[0].mxu0 %v659
      %v882 = vpop.f32.mrb[0].mxu0
      %v883 = vadd.f32 %v563, %v882
      %v884 = vpop.f32.mrb[0].mxu0
      %885 = vdwg.mxu0
      %vm886 = vcmp.gt.f32.partialorder %v728, 20.0
      %vm887 = vcmp.gt.f32.partialorder %v733, 20.0
      %vm888 = vcmp.gt.f32.partialorder %v738, 20.0
      %vm889 = vcmp.gt.f32.partialorder %v743, 20.0
      %vm890 = vcmp.gt.f32.partialorder %v748, 20.0
      %vm891 = vcmp.gt.f32.partialorder %v753, 20.0
      %vm892 = vcmp.gt.f32.partialorder %v758, 20.0
      %vm893 = vcmp.gt.f32.partialorder %v763, 20.0
      %vm894 = vcmp.gt.f32.partialorder %v768, 20.0
      %vm895 = vcmp.gt.f32.partialorder %v773, 20.0
      %vm896 = vcmp.gt.f32.partialorder %v778, 20.0
      %vm897 = vcmp.gt.f32.partialorder %v783, 20.0
      %vm898 = vcmp.gt.f32.partialorder %v788, 20.0
      %vm899 = vcmp.gt.f32.partialorder %v793, 20.0
      %vm900 = vcmp.gt.f32.partialorder %v798, 20.0
      %vm901 = vcmp.gt.f32.partialorder %v803, 20.0
      %vm902 = vcmp.gt.f32.partialorder %v808, 20.0
      %vm903 = vcmp.gt.f32.partialorder %v813, 20.0
      %vm904 = vcmp.gt.f32.partialorder %v818, 20.0
      %vm905 = vcmp.gt.f32.partialorder %v823, 20.0
      %vm906 = vcmp.gt.f32.partialorder %v828, 20.0
      %vm907 = vcmp.gt.f32.partialorder %v833, 20.0
      %vm908 = vcmp.gt.f32.partialorder %v838, 20.0
      %vm909 = vcmp.gt.f32.partialorder %v843, 20.0
      %vm910 = vcmp.gt.f32.partialorder %v848, 20.0
      %vm911 = vcmp.gt.f32.partialorder %v853, 20.0
      %vm912 = vcmp.gt.f32.partialorder %v858, 20.0
      %vm913 = vcmp.gt.f32.partialorder %v863, 20.0
      %vm914 = vcmp.gt.f32.partialorder %v868, 20.0
      %vm915 = vcmp.gt.f32.partialorder %v873, 20.0
      %vm916 = vcmp.gt.f32.partialorder %v878, 20.0
      %vm917 = vcmp.gt.f32.partialorder %v883, 20.0
      %v918 = vmul.f32 %v728, 1.442695
      %v919 = vpow.pop %v918
      %v920 = vmul.f32 %v733, 1.442695
      %v921 = vpow.pop %v920
      %v922 = vmul.f32 %v738, 1.442695
      %v923 = vpow.pop %v922
      %v924 = vmul.f32 %v743, 1.442695
      %v925 = vpow.pop %v924
      %v926 = vmul.f32 %v748, 1.442695
      %v927 = vpow.pop %v926
      %v928 = vmul.f32 %v753, 1.442695
      %v929 = vpow.pop %v928
      %v930 = vmul.f32 %v758, 1.442695
      %v931 = vpow.pop %v930
      %v932 = vmul.f32 %v763, 1.442695
      %v933 = vpow.pop %v932
      %v934 = vmul.f32 %v768, 1.442695
      %v935 = vpow.pop %v934
      %v936 = vmul.f32 %v773, 1.442695
      %v937 = vpow.pop %v936
      %v938 = vmul.f32 %v778, 1.442695
      %v939 = vpow.pop %v938
      %v940 = vmul.f32 %v783, 1.442695
      %v941 = vpow.pop %v940
      %v942 = vmul.f32 %v788, 1.442695
      %v943 = vpow.pop %v942
      %v944 = vmul.f32 %v793, 1.442695
      %v945 = vpow.pop %v944
      %v946 = vmul.f32 %v798, 1.442695
      %v947 = vpow.pop %v946
      %v948 = vmul.f32 %v803, 1.442695
      %v949 = vpow.pop %v948
      %v950 = vmul.f32 %v808, 1.442695
      %v951 = vpow.pop %v950
      %v952 = vmul.f32 %v813, 1.442695
      %v953 = vpow.pop %v952
      %v954 = vmul.f32 %v818, 1.442695
      %v955 = vpow.pop %v954
      %v956 = vmul.f32 %v823, 1.442695
      %v957 = vpow.pop %v956
      %v958 = vmul.f32 %v828, 1.442695
      %v959 = vpow.pop %v958
      %v960 = vmul.f32 %v833, 1.442695
      %v961 = vpow.pop %v960
      %v962 = vmul.f32 %v838, 1.442695
      %v963 = vpow.pop %v962
      %v964 = vmul.f32 %v843, 1.442695
      %v965 = vpow.pop %v964
      %v966 = vmul.f32 %v848, 1.442695
      %v967 = vpow.pop %v966
      %v968 = vmul.f32 %v853, 1.442695
      %v969 = vpow.pop %v968
      %v970 = vmul.f32 %v858, 1.442695
      %v971 = vpow.pop %v970
      %v972 = vmul.f32 %v863, 1.442695
      %v973 = vpow.pop %v972
      %v974 = vmul.f32 %v868, 1.442695
      %v975 = vpow.pop %v974
      %v976 = vmul.f32 %v873, 1.442695
      %v977 = vpow.pop %v976
      %v978 = vmul.f32 %v878, 1.442695
      %v979 = vpow.pop %v978
      %v980 = vmul.f32 %v883, 1.442695
      %v981 = vpow.pop %v980
      %v982 = vadd.f32 %v919, 1.0
      %v983 = vlog2.pop %v982
      %v984 = vmul.f32 %v983, 0.6931472
      %v985 = vmul.f32 -0.5, %v919
      %v986 = vadd.f32 %v985, 1.0
      %v987 = vmul.f32 %v986, %v919
      %v988 = vand.u32 2147483647, %v919
      %vm989 = vcmp.lt.f32.partialorder %v988, 0.0004427343
      %v990 = vsel %vm989, %v987, %v984
      %v991 = vadd.f32 %v921, 1.0
      %v992 = vlog2.pop %v991
      %v993 = vmul.f32 %v992, 0.6931472
      %v994 = vmul.f32 -0.5, %v921
      %v995 = vadd.f32 %v994, 1.0
      %v996 = vmul.f32 %v995, %v921
      %v997 = vand.u32 2147483647, %v921
      %vm998 = vcmp.lt.f32.partialorder %v997, 0.0004427343
      %v999 = vsel %vm998, %v996, %v993
      %v1000 = vadd.f32 %v923, 1.0
      %v1001 = vlog2.pop %v1000
      %v1002 = vmul.f32 %v1001, 0.6931472
      %v1003 = vmul.f32 -0.5, %v923
      %v1004 = vadd.f32 %v1003, 1.0
      %v1005 = vmul.f32 %v1004, %v923
      %v1006 = vand.u32 2147483647, %v923
      %vm1007 = vcmp.lt.f32.partialorder %v1006, 0.0004427343
      %v1008 = vsel %vm1007, %v1005, %v1002
      %v1009 = vadd.f32 %v925, 1.0
      %v1010 = vlog2.pop %v1009
      %v1011 = vmul.f32 %v1010, 0.6931472
      %v1012 = vmul.f32 -0.5, %v925
      %v1013 = vadd.f32 %v1012, 1.0
      %v1014 = vmul.f32 %v1013, %v925
      %v1015 = vand.u32 2147483647, %v925
      %vm1016 = vcmp.lt.f32.partialorder %v1015, 0.0004427343
      %v1017 = vsel %vm1016, %v1014, %v1011
      %v1018 = vadd.f32 %v927, 1.0
      %v1019 = vlog2.pop %v1018
      %v1020 = vmul.f32 %v1019, 0.6931472
      %v1021 = vmul.f32 -0.5, %v927
      %v1022 = vadd.f32 %v1021, 1.0
      %v1023 = vmul.f32 %v1022, %v927
      %v1024 = vand.u32 2147483647, %v927
      %vm1025 = vcmp.lt.f32.partialorder %v1024, 0.0004427343
      %v1026 = vsel %vm1025, %v1023, %v1020
      %v1027 = vadd.f32 %v929, 1.0
      %v1028 = vlog2.pop %v1027
      %v1029 = vmul.f32 %v1028, 0.6931472
      %v1030 = vmul.f32 -0.5, %v929
      %v1031 = vadd.f32 %v1030, 1.0
      %v1032 = vmul.f32 %v1031, %v929
      %v1033 = vand.u32 2147483647, %v929
      %vm1034 = vcmp.lt.f32.partialorder %v1033, 0.0004427343
      %v1035 = vsel %vm1034, %v1032, %v1029
      %v1036 = vadd.f32 %v931, 1.0
      %v1037 = vlog2.pop %v1036
      %v1038 = vmul.f32 %v1037, 0.6931472
      %v1039 = vmul.f32 -0.5, %v931
      %v1040 = vadd.f32 %v1039, 1.0
      %v1041 = vmul.f32 %v1040, %v931
      %v1042 = vand.u32 2147483647, %v931
      %vm1043 = vcmp.lt.f32.partialorder %v1042, 0.0004427343
      %v1044 = vsel %vm1043, %v1041, %v1038
      %v1045 = vadd.f32 %v933, 1.0
      %v1046 = vlog2.pop %v1045
      %v1047 = vmul.f32 %v1046, 0.6931472
      %v1048 = vmul.f32 -0.5, %v933
      %v1049 = vadd.f32 %v1048, 1.0
      %v1050 = vmul.f32 %v1049, %v933
      %v1051 = vand.u32 2147483647, %v933
      %vm1052 = vcmp.lt.f32.partialorder %v1051, 0.0004427343
      %v1053 = vsel %vm1052, %v1050, %v1047
      %v1054 = vadd.f32 %v935, 1.0
      %v1055 = vlog2.pop %v1054
      %v1056 = vmul.f32 %v1055, 0.6931472
      %v1057 = vmul.f32 -0.5, %v935
      %v1058 = vadd.f32 %v1057, 1.0
      %v1059 = vmul.f32 %v1058, %v935
      %v1060 = vand.u32 2147483647, %v935
      %vm1061 = vcmp.lt.f32.partialorder %v1060, 0.0004427343
      %v1062 = vsel %vm1061, %v1059, %v1056
      %v1063 = vadd.f32 %v937, 1.0
      %v1064 = vlog2.pop %v1063
      %v1065 = vmul.f32 %v1064, 0.6931472
      %v1066 = vmul.f32 -0.5, %v937
      %v1067 = vadd.f32 %v1066, 1.0
      %v1068 = vmul.f32 %v1067, %v937
      %v1069 = vand.u32 2147483647, %v937
      %vm1070 = vcmp.lt.f32.partialorder %v1069, 0.0004427343
      %v1071 = vsel %vm1070, %v1068, %v1065
      %v1072 = vadd.f32 %v939, 1.0
      %v1073 = vlog2.pop %v1072
      %v1074 = vmul.f32 %v1073, 0.6931472
      %v1075 = vmul.f32 -0.5, %v939
      %v1076 = vadd.f32 %v1075, 1.0
      %v1077 = vmul.f32 %v1076, %v939
      %v1078 = vand.u32 2147483647, %v939
      %vm1079 = vcmp.lt.f32.partialorder %v1078, 0.0004427343
      %v1080 = vsel %vm1079, %v1077, %v1074
      %v1081 = vadd.f32 %v941, 1.0
      %v1082 = vlog2.pop %v1081
      %v1083 = vmul.f32 %v1082, 0.6931472
      %v1084 = vmul.f32 -0.5, %v941
      %v1085 = vadd.f32 %v1084, 1.0
      %v1086 = vmul.f32 %v1085, %v941
      %v1087 = vand.u32 2147483647, %v941
      %vm1088 = vcmp.lt.f32.partialorder %v1087, 0.0004427343
      %v1089 = vsel %vm1088, %v1086, %v1083
      %v1090 = vadd.f32 %v943, 1.0
      %v1091 = vlog2.pop %v1090
      %v1092 = vmul.f32 %v1091, 0.6931472
      %v1093 = vmul.f32 -0.5, %v943
      %v1094 = vadd.f32 %v1093, 1.0
      %v1095 = vmul.f32 %v1094, %v943
      %v1096 = vand.u32 2147483647, %v943
      %vm1097 = vcmp.lt.f32.partialorder %v1096, 0.0004427343
      %v1098 = vsel %vm1097, %v1095, %v1092
      %v1099 = vadd.f32 %v945, 1.0
      %v1100 = vlog2.pop %v1099
      %v1101 = vmul.f32 %v1100, 0.6931472
      %v1102 = vmul.f32 -0.5, %v945
      %v1103 = vadd.f32 %v1102, 1.0
      %v1104 = vmul.f32 %v1103, %v945
      %v1105 = vand.u32 2147483647, %v945
      %vm1106 = vcmp.lt.f32.partialorder %v1105, 0.0004427343
      %v1107 = vsel %vm1106, %v1104, %v1101
      %v1108 = vadd.f32 %v947, 1.0
      %v1109 = vlog2.pop %v1108
      %v1110 = vmul.f32 %v1109, 0.6931472
      %v1111 = vmul.f32 -0.5, %v947
      %v1112 = vadd.f32 %v1111, 1.0
      %v1113 = vmul.f32 %v1112, %v947
      %v1114 = vand.u32 2147483647, %v947
      %vm1115 = vcmp.lt.f32.partialorder %v1114, 0.0004427343
      %v1116 = vsel %vm1115, %v1113, %v1110
      %v1117 = vadd.f32 %v949, 1.0
      %v1118 = vlog2.pop %v1117
      %v1119 = vmul.f32 %v1118, 0.6931472
      %v1120 = vmul.f32 -0.5, %v949
      %v1121 = vadd.f32 %v1120, 1.0
      %v1122 = vmul.f32 %v1121, %v949
      %v1123 = vand.u32 2147483647, %v949
      %vm1124 = vcmp.lt.f32.partialorder %v1123, 0.0004427343
      %v1125 = vsel %vm1124, %v1122, %v1119
      %v1126 = vadd.f32 %v951, 1.0
      %v1127 = vlog2.pop %v1126
      %v1128 = vmul.f32 %v1127, 0.6931472
      %v1129 = vmul.f32 -0.5, %v951
      %v1130 = vadd.f32 %v1129, 1.0
      %v1131 = vmul.f32 %v1130, %v951
      %v1132 = vand.u32 2147483647, %v951
      %vm1133 = vcmp.lt.f32.partialorder %v1132, 0.0004427343
      %v1134 = vsel %vm1133, %v1131, %v1128
      %v1135 = vadd.f32 %v953, 1.0
      %v1136 = vlog2.pop %v1135
      %v1137 = vmul.f32 %v1136, 0.6931472
      %v1138 = vmul.f32 -0.5, %v953
      %v1139 = vadd.f32 %v1138, 1.0
      %v1140 = vmul.f32 %v1139, %v953
      %v1141 = vand.u32 2147483647, %v953
      %vm1142 = vcmp.lt.f32.partialorder %v1141, 0.0004427343
      %v1143 = vsel %vm1142, %v1140, %v1137
      %v1144 = vadd.f32 %v955, 1.0
      %v1145 = vlog2.pop %v1144
      %v1146 = vmul.f32 %v1145, 0.6931472
      %v1147 = vmul.f32 -0.5, %v955
      %v1148 = vadd.f32 %v1147, 1.0
      %v1149 = vmul.f32 %v1148, %v955
      %v1150 = vand.u32 2147483647, %v955
      %vm1151 = vcmp.lt.f32.partialorder %v1150, 0.0004427343
      %v1152 = vsel %vm1151, %v1149, %v1146
      %v1153 = vadd.f32 %v957, 1.0
      %v1154 = vlog2.pop %v1153
      %v1155 = vmul.f32 %v1154, 0.6931472
      %v1156 = vmul.f32 -0.5, %v957
      %v1157 = vadd.f32 %v1156, 1.0
      %v1158 = vmul.f32 %v1157, %v957
      %v1159 = vand.u32 2147483647, %v957
      %vm1160 = vcmp.lt.f32.partialorder %v1159, 0.0004427343
      %v1161 = vsel %vm1160, %v1158, %v1155
      %v1162 = vadd.f32 %v959, 1.0
      %v1163 = vlog2.pop %v1162
      %v1164 = vmul.f32 %v1163, 0.6931472
      %v1165 = vmul.f32 -0.5, %v959
      %v1166 = vadd.f32 %v1165, 1.0
      %v1167 = vmul.f32 %v1166, %v959
      %v1168 = vand.u32 2147483647, %v959
      %vm1169 = vcmp.lt.f32.partialorder %v1168, 0.0004427343
      %v1170 = vsel %vm1169, %v1167, %v1164
      %v1171 = vadd.f32 %v961, 1.0
      %v1172 = vlog2.pop %v1171
      %v1173 = vmul.f32 %v1172, 0.6931472
      %v1174 = vmul.f32 -0.5, %v961
      %v1175 = vadd.f32 %v1174, 1.0
      %v1176 = vmul.f32 %v1175, %v961
      %v1177 = vand.u32 2147483647, %v961
      %vm1178 = vcmp.lt.f32.partialorder %v1177, 0.0004427343
      %v1179 = vsel %vm1178, %v1176, %v1173
      %v1180 = vadd.f32 %v963, 1.0
      %v1181 = vlog2.pop %v1180
      %v1182 = vmul.f32 %v1181, 0.6931472
      %v1183 = vmul.f32 -0.5, %v963
      %v1184 = vadd.f32 %v1183, 1.0
      %v1185 = vmul.f32 %v1184, %v963
      %v1186 = vand.u32 2147483647, %v963
      %vm1187 = vcmp.lt.f32.partialorder %v1186, 0.0004427343
      %v1188 = vsel %vm1187, %v1185, %v1182
      %v1189 = vadd.f32 %v965, 1.0
      %v1190 = vlog2.pop %v1189
      %v1191 = vmul.f32 %v1190, 0.6931472
      %v1192 = vmul.f32 -0.5, %v965
      %v1193 = vadd.f32 %v1192, 1.0
      %v1194 = vmul.f32 %v1193, %v965
      %v1195 = vand.u32 2147483647, %v965
      %vm1196 = vcmp.lt.f32.partialorder %v1195, 0.0004427343
      %v1197 = vsel %vm1196, %v1194, %v1191
      %v1198 = vadd.f32 %v967, 1.0
      %v1199 = vlog2.pop %v1198
      %v1200 = vmul.f32 %v1199, 0.6931472
      %v1201 = vmul.f32 -0.5, %v967
      %v1202 = vadd.f32 %v1201, 1.0
      %v1203 = vmul.f32 %v1202, %v967
      %v1204 = vand.u32 2147483647, %v967
      %vm1205 = vcmp.lt.f32.partialorder %v1204, 0.0004427343
      %v1206 = vsel %vm1205, %v1203, %v1200
      %v1207 = vadd.f32 %v969, 1.0
      %v1208 = vlog2.pop %v1207
      %v1209 = vmul.f32 %v1208, 0.6931472
      %v1210 = vmul.f32 -0.5, %v969
      %v1211 = vadd.f32 %v1210, 1.0
      %v1212 = vmul.f32 %v1211, %v969
      %v1213 = vand.u32 2147483647, %v969
      %vm1214 = vcmp.lt.f32.partialorder %v1213, 0.0004427343
      %v1215 = vsel %vm1214, %v1212, %v1209
      %v1216 = vadd.f32 %v971, 1.0
      %v1217 = vlog2.pop %v1216
      %v1218 = vmul.f32 %v1217, 0.6931472
      %v1219 = vmul.f32 -0.5, %v971
      %v1220 = vadd.f32 %v1219, 1.0
      %v1221 = vmul.f32 %v1220, %v971
      %v1222 = vand.u32 2147483647, %v971
      %vm1223 = vcmp.lt.f32.partialorder %v1222, 0.0004427343
      %v1224 = vsel %vm1223, %v1221, %v1218
      %v1225 = vadd.f32 %v973, 1.0
      %v1226 = vlog2.pop %v1225
      %v1227 = vmul.f32 %v1226, 0.6931472
      %v1228 = vmul.f32 -0.5, %v973
      %v1229 = vadd.f32 %v1228, 1.0
      %v1230 = vmul.f32 %v1229, %v973
      %v1231 = vand.u32 2147483647, %v973
      %vm1232 = vcmp.lt.f32.partialorder %v1231, 0.0004427343
      %v1233 = vsel %vm1232, %v1230, %v1227
      %v1234 = vadd.f32 %v975, 1.0
      %v1235 = vlog2.pop %v1234
      %v1236 = vmul.f32 %v1235, 0.6931472
      %v1237 = vmul.f32 -0.5, %v975
      %v1238 = vadd.f32 %v1237, 1.0
      %v1239 = vmul.f32 %v1238, %v975
      %v1240 = vand.u32 2147483647, %v975
      %vm1241 = vcmp.lt.f32.partialorder %v1240, 0.0004427343
      %v1242 = vsel %vm1241, %v1239, %v1236
      %v1243 = vadd.f32 %v977, 1.0
      %v1244 = vlog2.pop %v1243
      %v1245 = vmul.f32 %v1244, 0.6931472
      %v1246 = vmul.f32 -0.5, %v977
      %v1247 = vadd.f32 %v1246, 1.0
      %v1248 = vmul.f32 %v1247, %v977
      %v1249 = vand.u32 2147483647, %v977
      %vm1250 = vcmp.lt.f32.partialorder %v1249, 0.0004427343
      %v1251 = vsel %vm1250, %v1248, %v1245
      %v1252 = vadd.f32 %v979, 1.0
      %v1253 = vlog2.pop %v1252
      %v1254 = vmul.f32 %v1253, 0.6931472
      %v1255 = vmul.f32 -0.5, %v979
      %v1256 = vadd.f32 %v1255, 1.0
      %v1257 = vmul.f32 %v1256, %v979
      %v1258 = vand.u32 2147483647, %v979
      %vm1259 = vcmp.lt.f32.partialorder %v1258, 0.0004427343
      %v1260 = vsel %vm1259, %v1257, %v1254
      %v1261 = vadd.f32 %v981, 1.0
      %v1262 = vlog2.pop %v1261
      %v1263 = vmul.f32 %v1262, 0.6931472
      %v1264 = vmul.f32 -0.5, %v981
      %v1265 = vadd.f32 %v1264, 1.0
      %v1266 = vmul.f32 %v1265, %v981
      %v1267 = vand.u32 2147483647, %v981
      %vm1268 = vcmp.lt.f32.partialorder %v1267, 0.0004427343
      %v1269 = vsel %vm1268, %v1266, %v1263
      %v1270 = vsel %vm886, %v728, %v990
      %v1271 = vsel %vm887, %v733, %v999
      %v1272 = vsel %vm888, %v738, %v1008
      %v1273 = vsel %vm889, %v743, %v1017
      %v1274 = vsel %vm890, %v748, %v1026
      %v1275 = vsel %vm891, %v753, %v1035
      %v1276 = vsel %vm892, %v758, %v1044
      %v1277 = vsel %vm893, %v763, %v1053
      %v1278 = vsel %vm894, %v768, %v1062
      %v1279 = vsel %vm895, %v773, %v1071
      %v1280 = vsel %vm896, %v778, %v1080
      %v1281 = vsel %vm897, %v783, %v1089
      %v1282 = vsel %vm898, %v788, %v1098
      %v1283 = vsel %vm899, %v793, %v1107
      %v1284 = vsel %vm900, %v798, %v1116
      %v1285 = vsel %vm901, %v803, %v1125
      %v1286 = vsel %vm902, %v808, %v1134
      %v1287 = vsel %vm903, %v813, %v1143
      %v1288 = vsel %vm904, %v818, %v1152
      %v1289 = vsel %vm905, %v823, %v1161
      %v1290 = vsel %vm906, %v828, %v1170
      %v1291 = vsel %vm907, %v833, %v1179
      %v1292 = vsel %vm908, %v838, %v1188
      %v1293 = vsel %vm909, %v843, %v1197
      %v1294 = vsel %vm910, %v848, %v1206
      %v1295 = vsel %vm911, %v853, %v1215
      %v1296 = vsel %vm912, %v858, %v1224
      %v1297 = vsel %vm913, %v863, %v1233
      %v1298 = vsel %vm914, %v868, %v1242
      %v1299 = vsel %vm915, %v873, %v1251
      %v1300 = vsel %vm916, %v878, %v1260
      %v1301 = vsel %vm917, %v883, %v1269
      %v1302 = vld [vmem:[%s3] sm:$0xff]
      %v1303 = vld [vmem:[%s3 + $0x8] sm:$0xff]
      %v1304 = vld [vmem:[%s3 + $0x10] sm:$0xff]
      %v1305 = vld [vmem:[%s3 + $0x18] sm:$0xff]
      %v1306 = vld [vmem:[%s3 + $0x20] sm:$0xff]
      %v1307 = vld [vmem:[%s3 + $0x28] sm:$0xff]
      %v1308 = vld [vmem:[%s3 + $0x30] sm:$0xff]
      %v1309 = vld [vmem:[%s3 + $0x38] sm:$0xff]
      %v1310 = vld [vmem:[%s4] sm:$0x1]
      %v1312 = vlaneseq
      %v1313 = vshrl.u32 %v1312, 7
      %v1314 = vsub.s32 0, %v1313
      %v1315 = vrot.slane %v1310, %v1314
      %vm1317 = vcmask 523264
      %v1319 = vsel %vm1317, %v1270, 0
      %v1322 = vsel %vm1317, %v1271, 0
      %v1325 = vsel %vm1317, %v1272, 0
      %v1328 = vsel %vm1317, %v1273, 0
      %v1331 = vsel %vm1317, %v1274, 0
      %v1334 = vsel %vm1317, %v1275, 0
      %v1337 = vsel %vm1317, %v1276, 0
      %v1340 = vsel %vm1317, %v1277, 0
      %v1343 = vsel %vm1317, %v1278, 0
      %v1346 = vsel %vm1317, %v1279, 0
      %v1349 = vsel %vm1317, %v1280, 0
      %v1352 = vsel %vm1317, %v1281, 0
      %v1355 = vsel %vm1317, %v1282, 0
      %v1358 = vsel %vm1317, %v1283, 0
      %v1361 = vsel %vm1317, %v1284, 0
      %v1364 = vsel %vm1317, %v1285, 0
      %v1367 = vsel %vm1317, %v1286, 0
      %v1370 = vsel %vm1317, %v1287, 0
      %v1373 = vsel %vm1317, %v1288, 0
      %v1376 = vsel %vm1317, %v1289, 0
      %v1379 = vsel %vm1317, %v1290, 0
      %v1382 = vsel %vm1317, %v1291, 0
      %v1385 = vsel %vm1317, %v1292, 0
      %v1388 = vsel %vm1317, %v1293, 0
      %v1391 = vsel %vm1317, %v1294, 0
      %v1394 = vsel %vm1317, %v1295, 0
      %v1397 = vsel %vm1317, %v1296, 0
      %v1400 = vsel %vm1317, %v1297, 0
      %v1403 = vsel %vm1317, %v1298, 0
      %v1406 = vsel %vm1317, %v1299, 0
      %v1409 = vsel %vm1317, %v1300, 0
      %v1412 = vsel %vm1317, %v1301, 0
      %1414 = vmatprep.subr.mxu0 0.0
      %1415 = vmatpush1.msra.mxu0 %v1302
      %1416 = vmatprep.subr.mxu0 0.0
      %1417 = vmatpush1.msra.mxu0 %v1303
      %1418 = vmatprep.subr.mxu0 0.0
      %1419 = vmatpush1.msra.mxu0 %v1304
      %1420 = vmatprep.subr.mxu0 0.0
      %1421 = vmatpush1.msra.mxu0 %v1305
      %1422 = vmatprep.subr.mxu0 0.0
      %1423 = vmatpush1.msra.mxu0 %v1306
      %1424 = vmatprep.subr.mxu0 0.0
      %1425 = vmatpush1.msra.mxu0 %v1307
      %1426 = vmatprep.subr.mxu0 0.0
      %1427 = vmatpush1.msra.mxu0 %v1308
      %1428 = vmatprep.subr.mxu0 0.0
      %1429 = vmatpush1.msra.mxu0 %v1309
      %1430 = vmatprep.subr.mxu0 0.0
      %1431 = vmatpush1.msra.mxu0 0.0
      %1432 = vmatprep.subr.mxu0 0.0
      %1433 = vmatpush1.msra.mxu0 0.0
      %1434 = vmatprep.subr.mxu0 0.0
      %1435 = vmatpush1.msra.mxu0 0.0
      %1436 = vmatprep.subr.mxu0 0.0
      %1437 = vmatpush1.msra.mxu0 0.0
      %1438 = vmatprep.subr.mxu0 0.0
      %1439 = vmatpush1.msra.mxu0 0.0
      %1440 = vmatprep.subr.mxu0 0.0
      %1441 = vmatpush1.msra.mxu0 0.0
      %1442 = vmatprep.subr.mxu0 0.0
      %1443 = vmatpush1.msra.mxu0 0.0
      %1444 = vmatprep.subr.mxu0 0.0
      %1445 = vmatpush1.msra.mxu0 0.0
      %1446 = vmatprep.subr.mxu0 0.0
      %1447 = vmatpush1.msra.mxu0 0.0
      %1448 = vmatprep.subr.mxu0 0.0
      %1449 = vmatpush1.msra.mxu0 0.0
      %1450 = vmatprep.subr.mxu0 0.0
      %1451 = vmatpush1.msra.mxu0 0.0
      %1452 = vmatprep.subr.mxu0 0.0
      %1453 = vmatpush1.msra.mxu0 0.0
      %1454 = vmatprep.subr.mxu0 0.0
      %1455 = vmatpush1.msra.mxu0 0.0
      %1456 = vmatprep.subr.mxu0 0.0
      %1457 = vmatpush1.msra.mxu0 0.0
      %1458 = vmatprep.subr.mxu0 0.0
      %1459 = vmatpush1.msra.mxu0 0.0
      %1460 = vmatprep.subr.mxu0 0.0
      %1461 = vmatpush1.msra.mxu0 0.0
      %1462 = vmatprep.subr.mxu0 0.0
      %1463 = vmatpush1.msra.mxu0 0.0
      %1464 = vmatprep.subr.mxu0 0.0
      %1465 = vmatpush1.msra.mxu0 0.0
      %1466 = vmatprep.subr.mxu0 0.0
      %1467 = vmatpush1.msra.mxu0 0.0
      %1468 = vmatprep.subr.mxu0 0.0
      %1469 = vmatpush1.msra.mxu0 0.0
      %1470 = vmatprep.subr.mxu0 0.0
      %1471 = vmatpush1.msra.mxu0 0.0
      %1472 = vmatprep.subr.mxu0 0.0
      %1473 = vmatpush1.msra.mxu0 0.0
      %1474 = vmatprep.subr.mxu0 0.0
      %1475 = vmatpush1.msra.mxu0 0.0
      %1476 = vmatprep.subr.mxu0 0.0
      %1477 = vmatpush1.msra.mxu0 0.0
      %1478 = vmatprep.mubr.f32.mxu0 0.0
      %1479 = vmatmul.mubr.f32.gmra.mrb[0].mxu0 %v1319
      %v1480 = vpop.f32.mrb[0].mxu0
      %v1481 = vadd.f32 %v1315, %v1480
      %v1482 = vpop.f32.mrb[0].mxu0
      %1483 = vmatprep.mubr.f32.mxu0 0.0
      %1484 = vmatmul.mubr.f32.gmra.mrb[0].mxu0 %v1322
      %v1485 = vpop.f32.mrb[0].mxu0
      %v1486 = vadd.f32 %v1315, %v1485
      %v1487 = vpop.f32.mrb[0].mxu0
      %1488 = vmatprep.mubr.f32.mxu0 0.0
      %1489 = vmatmul.mubr.f32.gmra.mrb[0].mxu0 %v1325
      %v1490 = vpop.f32.mrb[0].mxu0
      %v1491 = vadd.f32 %v1315, %v1490
      %v1492 = vpop.f32.mrb[0].mxu0
      %1493 = vmatprep.mubr.f32.mxu0 0.0
      %1494 = vmatmul.mubr.f32.gmra.mrb[0].mxu0 %v1328
      %v1495 = vpop.f32.mrb[0].mxu0
      %v1496 = vadd.f32 %v1315, %v1495
      %v1497 = vpop.f32.mrb[0].mxu0
      %1498 = vmatprep.mubr.f32.mxu0 0.0
      %1499 = vmatmul.mubr.f32.gmra.mrb[0].mxu0 %v1331
      %v1500 = vpop.f32.mrb[0].mxu0
      %v1501 = vadd.f32 %v1315, %v1500
      %v1502 = vpop.f32.mrb[0].mxu0
      %1503 = vmatprep.mubr.f32.mxu0 0.0
      %1504 = vmatmul.mubr.f32.gmra.mrb[0].mxu0 %v1334
      %v1505 = vpop.f32.mrb[0].mxu0
      %v1506 = vadd.f32 %v1315, %v1505
      %v1507 = vpop.f32.mrb[0].mxu0
      %1508 = vmatprep.mubr.f32.mxu0 0.0
      %1509 = vmatmul.mubr.f32.gmra.mrb[0].mxu0 %v1337
      %v1510 = vpop.f32.mrb[0].mxu0
      %v1511 = vadd.f32 %v1315, %v1510
      %v1512 = vpop.f32.mrb[0].mxu0
      %1513 = vmatprep.mubr.f32.mxu0 0.0
      %1514 = vmatmul.mubr.f32.gmra.mrb[0].mxu0 %v1340
      %v1515 = vpop.f32.mrb[0].mxu0
      %v1516 = vadd.f32 %v1315, %v1515
      %v1517 = vpop.f32.mrb[0].mxu0
      %1518 = vmatprep.mubr.f32.mxu0 0.0
      %1519 = vmatmul.mubr.f32.gmra.mrb[0].mxu0 %v1343
      %v1520 = vpop.f32.mrb[0].mxu0
      %v1521 = vadd.f32 %v1315, %v1520
      %v1522 = vpop.f32.mrb[0].mxu0
      %1523 = vmatprep.mubr.f32.mxu0 0.0
      %1524 = vmatmul.mubr.f32.gmra.mrb[0].mxu0 %v1346
      %v1525 = vpop.f32.mrb[0].mxu0
      %v1526 = vadd.f32 %v1315, %v1525
      %v1527 = vpop.f32.mrb[0].mxu0
      %1528 = vmatprep.mubr.f32.mxu0 0.0
      %1529 = vmatmul.mubr.f32.gmra.mrb[0].mxu0 %v1349
      %v1530 = vpop.f32.mrb[0].mxu0
      %v1531 = vadd.f32 %v1315, %v1530
      %v1532 = vpop.f32.mrb[0].mxu0
      %1533 = vmatprep.mubr.f32.mxu0 0.0
      %1534 = vmatmul.mubr.f32.gmra.mrb[0].mxu0 %v1352
      %v1535 = vpop.f32.mrb[0].mxu0
      %v1536 = vadd.f32 %v1315, %v1535
      %v1537 = vpop.f32.mrb[0].mxu0
      %1538 = vmatprep.mubr.f32.mxu0 0.0
      %1539 = vmatmul.mubr.f32.gmra.mrb[0].mxu0 %v1355
      %v1540 = vpop.f32.mrb[0].mxu0
      %v1541 = vadd.f32 %v1315, %v1540
      %v1542 = vpop.f32.mrb[0].mxu0
      %1543 = vmatprep.mubr.f32.mxu0 0.0
      %1544 = vmatmul.mubr.f32.gmra.mrb[0].mxu0 %v1358
      %v1545 = vpop.f32.mrb[0].mxu0
      %v1546 = vadd.f32 %v1315, %v1545
      %v1547 = vpop.f32.mrb[0].mxu0
      %1548 = vmatprep.mubr.f32.mxu0 0.0
      %1549 = vmatmul.mubr.f32.gmra.mrb[0].mxu0 %v1361
      %v1550 = vpop.f32.mrb[0].mxu0
      %v1551 = vadd.f32 %v1315, %v1550
      %v1552 = vpop.f32.mrb[0].mxu0
      %1553 = vmatprep.mubr.f32.mxu0 0.0
      %1554 = vmatmul.mubr.f32.gmra.mrb[0].mxu0 %v1364
      %v1555 = vpop.f32.mrb[0].mxu0
      %v1556 = vadd.f32 %v1315, %v1555
      %v1557 = vpop.f32.mrb[0].mxu0
      %1558 = vmatprep.mubr.f32.mxu0 0.0
      %1559 = vmatmul.mubr.f32.gmra.mrb[0].mxu0 %v1367
      %v1560 = vpop.f32.mrb[0].mxu0
      %v1561 = vadd.f32 %v1315, %v1560
      %v1562 = vpop.f32.mrb[0].mxu0
      %1563 = vmatprep.mubr.f32.mxu0 0.0
      %1564 = vmatmul.mubr.f32.gmra.mrb[0].mxu0 %v1370
      %v1565 = vpop.f32.mrb[0].mxu0
      %v1566 = vadd.f32 %v1315, %v1565
      %v1567 = vpop.f32.mrb[0].mxu0
      %1568 = vmatprep.mubr.f32.mxu0 0.0
      %1569 = vmatmul.mubr.f32.gmra.mrb[0].mxu0 %v1373
      %v1570 = vpop.f32.mrb[0].mxu0
      %v1571 = vadd.f32 %v1315, %v1570
      %v1572 = vpop.f32.mrb[0].mxu0
      %1573 = vmatprep.mubr.f32.mxu0 0.0
      %1574 = vmatmul.mubr.f32.gmra.mrb[0].mxu0 %v1376
      %v1575 = vpop.f32.mrb[0].mxu0
      %v1576 = vadd.f32 %v1315, %v1575
      %v1577 = vpop.f32.mrb[0].mxu0
      %1578 = vmatprep.mubr.f32.mxu0 0.0
      %1579 = vmatmul.mubr.f32.gmra.mrb[0].mxu0 %v1379
      %v1580 = vpop.f32.mrb[0].mxu0
      %v1581 = vadd.f32 %v1315, %v1580
      %v1582 = vpop.f32.mrb[0].mxu0
      %1583 = vmatprep.mubr.f32.mxu0 0.0
      %1584 = vmatmul.mubr.f32.gmra.mrb[0].mxu0 %v1382
      %v1585 = vpop.f32.mrb[0].mxu0
      %v1586 = vadd.f32 %v1315, %v1585
      %v1587 = vpop.f32.mrb[0].mxu0
      %1588 = vmatprep.mubr.f32.mxu0 0.0
      %1589 = vmatmul.mubr.f32.gmra.mrb[0].mxu0 %v1385
      %v1590 = vpop.f32.mrb[0].mxu0
      %v1591 = vadd.f32 %v1315, %v1590
      %v1592 = vpop.f32.mrb[0].mxu0
      %1593 = vmatprep.mubr.f32.mxu0 0.0
      %1594 = vmatmul.mubr.f32.gmra.mrb[0].mxu0 %v1388
      %v1595 = vpop.f32.mrb[0].mxu0
      %v1596 = vadd.f32 %v1315, %v1595
      %v1597 = vpop.f32.mrb[0].mxu0
      %1598 = vmatprep.mubr.f32.mxu0 0.0
      %1599 = vmatmul.mubr.f32.gmra.mrb[0].mxu0 %v1391
      %v1600 = vpop.f32.mrb[0].mxu0
      %v1601 = vadd.f32 %v1315, %v1600
      %v1602 = vpop.f32.mrb[0].mxu0
      %1603 = vmatprep.mubr.f32.mxu0 0.0
      %1604 = vmatmul.mubr.f32.gmra.mrb[0].mxu0 %v1394
      %v1605 = vpop.f32.mrb[0].mxu0
      %v1606 = vadd.f32 %v1315, %v1605
      %v1607 = vpop.f32.mrb[0].mxu0
      %1608 = vmatprep.mubr.f32.mxu0 0.0
      %1609 = vmatmul.mubr.f32.gmra.mrb[0].mxu0 %v1397
      %v1610 = vpop.f32.mrb[0].mxu0
      %v1611 = vadd.f32 %v1315, %v1610
      %v1612 = vpop.f32.mrb[0].mxu0
      %1613 = vmatprep.mubr.f32.mxu0 0.0
      %1614 = vmatmul.mubr.f32.gmra.mrb[0].mxu0 %v1400
      %v1615 = vpop.f32.mrb[0].mxu0
      %v1616 = vadd.f32 %v1315, %v1615
      %v1617 = vpop.f32.mrb[0].mxu0
      %1618 = vmatprep.mubr.f32.mxu0 0.0
      %1619 = vmatmul.mubr.f32.gmra.mrb[0].mxu0 %v1403
      %v1620 = vpop.f32.mrb[0].mxu0
      %v1621 = vadd.f32 %v1315, %v1620
      %v1622 = vpop.f32.mrb[0].mxu0
      %1623 = vmatprep.mubr.f32.mxu0 0.0
      %1624 = vmatmul.mubr.f32.gmra.mrb[0].mxu0 %v1406
      %v1625 = vpop.f32.mrb[0].mxu0
      %v1626 = vadd.f32 %v1315, %v1625
      %v1627 = vpop.f32.mrb[0].mxu0
      %1628 = vmatprep.mubr.f32.mxu0 0.0
      %1629 = vmatmul.mubr.f32.gmra.mrb[0].mxu0 %v1409
      %v1630 = vpop.f32.mrb[0].mxu0
      %v1631 = vadd.f32 %v1315, %v1630
      %v1632 = vpop.f32.mrb[0].mxu0
      %1633 = vmatprep.mubr.f32.mxu0 0.0
      %1634 = vmatmul.mubr.f32.gmra.mrb[0].mxu0 %v1412
      %v1635 = vpop.f32.mrb[0].mxu0
      %v1636 = vadd.f32 %v1315, %v1635
      %v1637 = vpop.f32.mrb[0].mxu0
      %1638 = vdwg.mxu0
      %v1639 = vxor.u32 %v1481, 2147483648
      %v1640 = vxor.u32 %v1486, 2147483648
      %v1641 = vxor.u32 %v1491, 2147483648
      %v1642 = vxor.u32 %v1496, 2147483648
      %v1643 = vxor.u32 %v1501, 2147483648
      %v1644 = vxor.u32 %v1506, 2147483648
      %v1645 = vxor.u32 %v1511, 2147483648
      %v1646 = vxor.u32 %v1516, 2147483648
      %v1647 = vxor.u32 %v1521, 2147483648
      %v1648 = vxor.u32 %v1526, 2147483648
      %v1649 = vxor.u32 %v1531, 2147483648
      %v1650 = vxor.u32 %v1536, 2147483648
      %v1651 = vxor.u32 %v1541, 2147483648
      %v1652 = vxor.u32 %v1546, 2147483648
      %v1653 = vxor.u32 %v1551, 2147483648
      %v1654 = vxor.u32 %v1556, 2147483648
      %v1655 = vxor.u32 %v1561, 2147483648
      %v1656 = vxor.u32 %v1566, 2147483648
      %v1657 = vxor.u32 %v1571, 2147483648
      %v1658 = vxor.u32 %v1576, 2147483648
      %v1659 = vxor.u32 %v1581, 2147483648
      %v1660 = vxor.u32 %v1586, 2147483648
      %v1661 = vxor.u32 %v1591, 2147483648
      %v1662 = vxor.u32 %v1596, 2147483648
      %v1663 = vxor.u32 %v1601, 2147483648
      %v1664 = vxor.u32 %v1606, 2147483648
      %v1665 = vxor.u32 %v1611, 2147483648
      %v1666 = vxor.u32 %v1616, 2147483648
      %v1667 = vxor.u32 %v1621, 2147483648
      %v1668 = vxor.u32 %v1626, 2147483648
      %v1669 = vxor.u32 %v1631, 2147483648
      %v1670 = vxor.u32 %v1636, 2147483648
      %v1671 = vmul.f32 %v1639, 1.442695
      %v1672 = vpow.pop %v1671
      %v1673 = vmul.f32 %v1640, 1.442695
      %v1674 = vpow.pop %v1673
      %v1675 = vmul.f32 %v1641, 1.442695
      %v1676 = vpow.pop %v1675
      %v1677 = vmul.f32 %v1642, 1.442695
      %v1678 = vpow.pop %v1677
      %v1679 = vmul.f32 %v1643, 1.442695
      %v1680 = vpow.pop %v1679
      %v1681 = vmul.f32 %v1644, 1.442695
      %v1682 = vpow.pop %v1681
      %v1683 = vmul.f32 %v1645, 1.442695
      %v1684 = vpow.pop %v1683
      %v1685 = vmul.f32 %v1646, 1.442695
      %v1686 = vpow.pop %v1685
      %v1687 = vmul.f32 %v1647, 1.442695
      %v1688 = vpow.pop %v1687
      %v1689 = vmul.f32 %v1648, 1.442695
      %v1690 = vpow.pop %v1689
      %v1691 = vmul.f32 %v1649, 1.442695
      %v1692 = vpow.pop %v1691
      %v1693 = vmul.f32 %v1650, 1.442695
      %v1694 = vpow.pop %v1693
      %v1695 = vmul.f32 %v1651, 1.442695
      %v1696 = vpow.pop %v1695
      %v1697 = vmul.f32 %v1652, 1.442695
      %v1698 = vpow.pop %v1697
      %v1699 = vmul.f32 %v1653, 1.442695
      %v1700 = vpow.pop %v1699
      %v1701 = vmul.f32 %v1654, 1.442695
      %v1702 = vpow.pop %v1701
      %v1703 = vmul.f32 %v1655, 1.442695
      %v1704 = vpow.pop %v1703
      %v1705 = vmul.f32 %v1656, 1.442695
      %v1706 = vpow.pop %v1705
      %v1707 = vmul.f32 %v1657, 1.442695
      %v1708 = vpow.pop %v1707
      %v1709 = vmul.f32 %v1658, 1.442695
      %v1710 = vpow.pop %v1709
      %v1711 = vmul.f32 %v1659, 1.442695
      %v1712 = vpow.pop %v1711
      %v1713 = vmul.f32 %v1660, 1.442695
      %v1714 = vpow.pop %v1713
      %v1715 = vmul.f32 %v1661, 1.442695
      %v1716 = vpow.pop %v1715
      %v1717 = vmul.f32 %v1662, 1.442695
      %v1718 = vpow.pop %v1717
      %v1719 = vmul.f32 %v1663, 1.442695
      %v1720 = vpow.pop %v1719
      %v1721 = vmul.f32 %v1664, 1.442695
      %v1722 = vpow.pop %v1721
      %v1723 = vmul.f32 %v1665, 1.442695
      %v1724 = vpow.pop %v1723
      %v1725 = vmul.f32 %v1666, 1.442695
      %v1726 = vpow.pop %v1725
      %v1727 = vmul.f32 %v1667, 1.442695
      %v1728 = vpow.pop %v1727
      %v1729 = vmul.f32 %v1668, 1.442695
      %v1730 = vpow.pop %v1729
      %v1731 = vmul.f32 %v1669, 1.442695
      %v1732 = vpow.pop %v1731
      %v1733 = vmul.f32 %v1670, 1.442695
      %v1734 = vpow.pop %v1733
      %v1735 = vadd.f32 %v1672, 1.0
      %v1736 = vadd.f32 %v1674, 1.0
      %v1737 = vadd.f32 %v1676, 1.0
      %v1738 = vadd.f32 %v1678, 1.0
      %v1739 = vadd.f32 %v1680, 1.0
      %v1740 = vadd.f32 %v1682, 1.0
      %v1741 = vadd.f32 %v1684, 1.0
      %v1742 = vadd.f32 %v1686, 1.0
      %v1743 = vadd.f32 %v1688, 1.0
      %v1744 = vadd.f32 %v1690, 1.0
      %v1745 = vadd.f32 %v1692, 1.0
      %v1746 = vadd.f32 %v1694, 1.0
      %v1747 = vadd.f32 %v1696, 1.0
      %v1748 = vadd.f32 %v1698, 1.0
      %v1749 = vadd.f32 %v1700, 1.0
      %v1750 = vadd.f32 %v1702, 1.0
      %v1751 = vadd.f32 %v1704, 1.0
      %v1752 = vadd.f32 %v1706, 1.0
      %v1753 = vadd.f32 %v1708, 1.0
      %v1754 = vadd.f32 %v1710, 1.0
      %v1755 = vadd.f32 %v1712, 1.0
      %v1756 = vadd.f32 %v1714, 1.0
      %v1757 = vadd.f32 %v1716, 1.0
      %v1758 = vadd.f32 %v1718, 1.0
      %v1759 = vadd.f32 %v1720, 1.0
      %v1760 = vadd.f32 %v1722, 1.0
      %v1761 = vadd.f32 %v1724, 1.0
      %v1762 = vadd.f32 %v1726, 1.0
      %v1763 = vadd.f32 %v1728, 1.0
      %v1764 = vadd.f32 %v1730, 1.0
      %v1765 = vadd.f32 %v1732, 1.0
      %v1766 = vadd.f32 %v1734, 1.0
      %v1767 = vrcp.pop %v1735
      %v1768 = vmul.f32 1.0, %v1767
      %v1769 = vrcp.pop %v1736
      %v1770 = vmul.f32 1.0, %v1769
      %v1771 = vrcp.pop %v1737
      %v1772 = vmul.f32 1.0, %v1771
      %v1773 = vrcp.pop %v1738
      %v1774 = vmul.f32 1.0, %v1773
      %v1775 = vrcp.pop %v1739
      %v1776 = vmul.f32 1.0, %v1775
      %v1777 = vrcp.pop %v1740
      %v1778 = vmul.f32 1.0, %v1777
      %v1779 = vrcp.pop %v1741
      %v1780 = vmul.f32 1.0, %v1779
      %v1781 = vrcp.pop %v1742
      %v1782 = vmul.f32 1.0, %v1781
      %v1783 = vrcp.pop %v1743
      %v1784 = vmul.f32 1.0, %v1783
      %v1785 = vrcp.pop %v1744
      %v1786 = vmul.f32 1.0, %v1785
      %v1787 = vrcp.pop %v1745
      %v1788 = vmul.f32 1.0, %v1787
      %v1789 = vrcp.pop %v1746
      %v1790 = vmul.f32 1.0, %v1789
      %v1791 = vrcp.pop %v1747
      %v1792 = vmul.f32 1.0, %v1791
      %v1793 = vrcp.pop %v1748
      %v1794 = vmul.f32 1.0, %v1793
      %v1795 = vrcp.pop %v1749
      %v1796 = vmul.f32 1.0, %v1795
      %v1797 = vrcp.pop %v1750
      %v1798 = vmul.f32 1.0, %v1797
      %v1799 = vrcp.pop %v1751
      %v1800 = vmul.f32 1.0, %v1799
      %v1801 = vrcp.pop %v1752
      %v1802 = vmul.f32 1.0, %v1801
      %v1803 = vrcp.pop %v1753
      %v1804 = vmul.f32 1.0, %v1803
      %v1805 = vrcp.pop %v1754
      %v1806 = vmul.f32 1.0, %v1805
      %v1807 = vrcp.pop %v1755
      %v1808 = vmul.f32 1.0, %v1807
      %v1809 = vrcp.pop %v1756
      %v1810 = vmul.f32 1.0, %v1809
      %v1811 = vrcp.pop %v1757
      %v1812 = vmul.f32 1.0, %v1811
      %v1813 = vrcp.pop %v1758
      %v1814 = vmul.f32 1.0, %v1813
      %v1815 = vrcp.pop %v1759
      %v1816 = vmul.f32 1.0, %v1815
      %v1817 = vrcp.pop %v1760
      %v1818 = vmul.f32 1.0, %v1817
      %v1819 = vrcp.pop %v1761
      %v1820 = vmul.f32 1.0, %v1819
      %v1821 = vrcp.pop %v1762
      %v1822 = vmul.f32 1.0, %v1821
      %v1823 = vrcp.pop %v1763
      %v1824 = vmul.f32 1.0, %v1823
      %v1825 = vrcp.pop %v1764
      %v1826 = vmul.f32 1.0, %v1825
      %v1827 = vrcp.pop %v1765
      %v1828 = vmul.f32 1.0, %v1827
      %v1829 = vrcp.pop %v1766
      %v1830 = vmul.f32 1.0, %v1829
      %v1831 = vmul.f32 %v1768, 1.002
      %v1832 = vmul.f32 %v1770, 1.002
      %v1833 = vmul.f32 %v1772, 1.002
      %v1834 = vmul.f32 %v1774, 1.002
      %v1835 = vmul.f32 %v1776, 1.002
      %v1836 = vmul.f32 %v1778, 1.002
      %v1837 = vmul.f32 %v1780, 1.002
      %v1838 = vmul.f32 %v1782, 1.002
      %v1839 = vmul.f32 %v1784, 1.002
      %v1840 = vmul.f32 %v1786, 1.002
      %v1841 = vmul.f32 %v1788, 1.002
      %v1842 = vmul.f32 %v1790, 1.002
      %v1843 = vmul.f32 %v1792, 1.002
      %v1844 = vmul.f32 %v1794, 1.002
      %v1845 = vmul.f32 %v1796, 1.002
      %v1846 = vmul.f32 %v1798, 1.002
      %v1847 = vmul.f32 %v1800, 1.002
      %v1848 = vmul.f32 %v1802, 1.002
      %v1849 = vmul.f32 %v1804, 1.002
      %v1850 = vmul.f32 %v1806, 1.002
      %v1851 = vmul.f32 %v1808, 1.002
      %v1852 = vmul.f32 %v1810, 1.002
      %v1853 = vmul.f32 %v1812, 1.002
      %v1854 = vmul.f32 %v1814, 1.002
      %v1855 = vmul.f32 %v1816, 1.002
      %v1856 = vmul.f32 %v1818, 1.002
      %v1857 = vmul.f32 %v1820, 1.002
      %v1858 = vmul.f32 %v1822, 1.002
      %v1859 = vmul.f32 %v1824, 1.002
      %v1860 = vmul.f32 %v1826, 1.002
      %v1861 = vmul.f32 %v1828, 1.002
      %v1862 = vmul.f32 %v1830, 1.002
      %v1863 = vsub.f32 %v1831, 0.001
      %v1864 = vsub.f32 %v1832, 0.001
      %v1865 = vsub.f32 %v1833, 0.001
      %v1866 = vsub.f32 %v1834, 0.001
      %v1867 = vsub.f32 %v1835, 0.001
      %v1868 = vsub.f32 %v1836, 0.001
      %v1869 = vsub.f32 %v1837, 0.001
      %v1870 = vsub.f32 %v1838, 0.001
      %v1871 = vsub.f32 %v1839, 0.001
      %v1872 = vsub.f32 %v1840, 0.001
      %v1873 = vsub.f32 %v1841, 0.001
      %v1874 = vsub.f32 %v1842, 0.001
      %v1875 = vsub.f32 %v1843, 0.001
      %v1876 = vsub.f32 %v1844, 0.001
      %v1877 = vsub.f32 %v1845, 0.001
      %v1878 = vsub.f32 %v1846, 0.001
      %v1879 = vsub.f32 %v1847, 0.001
      %v1880 = vsub.f32 %v1848, 0.001
      %v1881 = vsub.f32 %v1849, 0.001
      %v1882 = vsub.f32 %v1850, 0.001
      %v1883 = vsub.f32 %v1851, 0.001
      %v1884 = vsub.f32 %v1852, 0.001
      %v1885 = vsub.f32 %v1853, 0.001
      %v1886 = vsub.f32 %v1854, 0.001
      %v1887 = vsub.f32 %v1855, 0.001
      %v1888 = vsub.f32 %v1856, 0.001
      %v1889 = vsub.f32 %v1857, 0.001
      %v1890 = vsub.f32 %v1858, 0.001
      %v1891 = vsub.f32 %v1859, 0.001
      %v1892 = vsub.f32 %v1860, 0.001
      %v1893 = vsub.f32 %v1861, 0.001
      %v1894 = vsub.f32 %v1862, 0.001
      %v1895 = vlaneseq
      %v1896 = vand.u32 %v1895, 127
      %vm1897 = vcmp.eq.s32.totalorder %v1896, 0
      %v1898 = vsel %vm1897, %v1481, %v1863
      %v1899 = vsel %vm1897, %v1486, %v1864
      %v1900 = vsel %vm1897, %v1491, %v1865
      %v1901 = vsel %vm1897, %v1496, %v1866
      %v1902 = vsel %vm1897, %v1501, %v1867
      %v1903 = vsel %vm1897, %v1506, %v1868
      %v1904 = vsel %vm1897, %v1511, %v1869
      %v1905 = vsel %vm1897, %v1516, %v1870
      %v1906 = vsel %vm1897, %v1521, %v1871
      %v1907 = vsel %vm1897, %v1526, %v1872
      %v1908 = vsel %vm1897, %v1531, %v1873
      %v1909 = vsel %vm1897, %v1536, %v1874
      %v1910 = vsel %vm1897, %v1541, %v1875
      %v1911 = vsel %vm1897, %v1546, %v1876
      %v1912 = vsel %vm1897, %v1551, %v1877
      %v1913 = vsel %vm1897, %v1556, %v1878
      %v1914 = vsel %vm1897, %v1561, %v1879
      %v1915 = vsel %vm1897, %v1566, %v1880
      %v1916 = vsel %vm1897, %v1571, %v1881
      %v1917 = vsel %vm1897, %v1576, %v1882
      %v1918 = vsel %vm1897, %v1581, %v1883
      %v1919 = vsel %vm1897, %v1586, %v1884
      %v1920 = vsel %vm1897, %v1591, %v1885
      %v1921 = vsel %vm1897, %v1596, %v1886
      %v1922 = vsel %vm1897, %v1601, %v1887
      %v1923 = vsel %vm1897, %v1606, %v1888
      %v1924 = vsel %vm1897, %v1611, %v1889
      %v1925 = vsel %vm1897, %v1616, %v1890
      %v1926 = vsel %vm1897, %v1621, %v1891
      %v1927 = vsel %vm1897, %v1626, %v1892
      %v1928 = vsel %vm1897, %v1631, %v1893
      %v1929 = vsel %vm1897, %v1636, %v1894
      %vm1930 = vcmask 31744
      %1931 = vst.msk [vmem:[%s262] sm:$0xff] %vm1930, %v1898
      %1932 = vst.msk [vmem:[%s262 + $0x8] sm:$0xff] %vm1930, %v1899
      %1933 = vst.msk [vmem:[%s262 + $0x10] sm:$0xff] %vm1930, %v1900
      %1934 = vst.msk [vmem:[%s262 + $0x18] sm:$0xff] %vm1930, %v1901
      %1935 = vst.msk [vmem:[%s262 + $0x20] sm:$0xff] %vm1930, %v1902
      %1936 = vst.msk [vmem:[%s262 + $0x28] sm:$0xff] %vm1930, %v1903
      %1937 = vst.msk [vmem:[%s262 + $0x30] sm:$0xff] %vm1930, %v1904
      %1938 = vst.msk [vmem:[%s262 + $0x38] sm:$0xff] %vm1930, %v1905
      %1939 = vst.msk [vmem:[%s262 + $0x40] sm:$0xff] %vm1930, %v1906
      %1940 = vst.msk [vmem:[%s262 + $0x48] sm:$0xff] %vm1930, %v1907
      %1941 = vst.msk [vmem:[%s262 + $0x50] sm:$0xff] %vm1930, %v1908
      %1942 = vst.msk [vmem:[%s262 + $0x58] sm:$0xff] %vm1930, %v1909
      %1943 = vst.msk [vmem:[%s262 + $0x60] sm:$0xff] %vm1930, %v1910
      %1944 = vst.msk [vmem:[%s262 + $0x68] sm:$0xff] %vm1930, %v1911
      %1945 = vst.msk [vmem:[%s262 + $0x70] sm:$0xff] %vm1930, %v1912
      %1946 = vst.msk [vmem:[%s262 + $0x78] sm:$0xff] %vm1930, %v1913
      %1947 = vst.msk [vmem:[%s262 + $0x80] sm:$0xff] %vm1930, %v1914
      %1948 = vst.msk [vmem:[%s262 + $0x88] sm:$0xff] %vm1930, %v1915
      %1949 = vst.msk [vmem:[%s262 + $0x90] sm:$0xff] %vm1930, %v1916
      %1950 = vst.msk [vmem:[%s262 + $0x98] sm:$0xff] %vm1930, %v1917
      %1951 = vst.msk [vmem:[%s262 + $0xa0] sm:$0xff] %vm1930, %v1918
      %1952 = vst.msk [vmem:[%s262 + $0xa8] sm:$0xff] %vm1930, %v1919
      %1953 = vst.msk [vmem:[%s262 + $0xb0] sm:$0xff] %vm1930, %v1920
      %1954 = vst.msk [vmem:[%s262 + $0xb8] sm:$0xff] %vm1930, %v1921
      %1955 = vst.msk [vmem:[%s262 + $0xc0] sm:$0xff] %vm1930, %v1922
      %1956 = vst.msk [vmem:[%s262 + $0xc8] sm:$0xff] %vm1930, %v1923
      %1957 = vst.msk [vmem:[%s262 + $0xd0] sm:$0xff] %vm1930, %v1924
      %1958 = vst.msk [vmem:[%s262 + $0xd8] sm:$0xff] %vm1930, %v1925
      %1959 = vst.msk [vmem:[%s262 + $0xe0] sm:$0xff] %vm1930, %v1926
      %1960 = vst.msk [vmem:[%s262 + $0xe8] sm:$0xff] %vm1930, %v1927
      %1961 = vst.msk [vmem:[%s262 + $0xf0] sm:$0xff] %vm1930, %v1928
      %1962 = vst.msk [vmem:[%s262 + $0xf8] sm:$0xff] %vm1930, %v1929
      %s1963 = smul.u32 32, %s21
      %p1964 = scmp.lt.s32.totalorder %s20, 1
      %s1965 = scalar_select %p1964, %s20, 1
      %p1966 = scmp.lt.s32.totalorder %s1963, 31
      %s1967 = scalar_select %p1966, %s1963, 31
      %s1968 = smul.addr %s1965, 32
      %s1969 = sadd.s32 %s1967, %s1968
      %s1970 = smul.addr %s1969, 8
      %s1971 = scalar_lea.vmem %s5, %s1970
      // Predicated region
      $region41: #{osg_decoder_forward.1} parent=39 // pred_check
        %p1972 = pneg %p160
      $region42: #{osg_decoder_forward.1} parent=39 // pred_check_branch
        %1974 = sbr.rel (%p1972) target = $region44
      $region43: #{osg_decoder_forward.1} parent=39 // pred_region
        %s1975 = smul.u32 32, %s21
      $region44: #{osg_decoder_forward.1} parent=39 // pred_fallthru
        _
    $region40: #{osg_decoder_forward.1} parent=5 // pred_fallthru
      _
    %p1976 = scmp.le.s32.totalorder 2, %s11
    // Predicated region
    $region45: #{osg_decoder_forward.1} parent=5 // pred_check
      %p1977 = pneg %p1976
    $region46: #{osg_decoder_forward.1} parent=5 // pred_check_branch
      %1979 = sbr.rel (%p1977) target = $region48
    $region47: #{osg_decoder_forward.1} parent=5 // pred_region
      %s1980 = ssub.s32 %s11, 2
      // Predicated region
      $region49: #{osg_decoder_forward.1} parent=47 // pred_check
        %p1981 = pneg %p166
      $region50: #{osg_decoder_forward.1} parent=47 // pred_check_branch
        %1983 = sbr.rel (%p1981) target = $region52
      $region51: #{osg_decoder_forward.1} parent=47 // pred_region
        %s1984 = smul.u32 32, %s23
        %p1985 = scmp.lt.s32.totalorder %s22, 1
        %s1986 = scalar_select %p1985, %s22, 1
        %p1987 = scmp.lt.s32.totalorder %s1984, 31
        %s1988 = scalar_select %p1987, %s1984, 31
        %s1989 = smul.addr %s1986, 32
        %s1990 = sadd.s32 %s1988, %s1989
        %s1991 = smul.addr %s1990, 8
        %s1992 = scalar_lea.vmem %s5, %s1991
      $region52: #{osg_decoder_forward.1} parent=47 // pred_fallthru
        _
    $region48: #{osg_decoder_forward.1} parent=5 // pred_fallthru
      _
  $region6: #{osg_decoder_forward.1} parent=0 // loop_footer
    %s15 = sadd.s32 1, %s11
  $region7: #{osg_decoder_forward.1} parent=0 // loop_footer_branch
    %10 = sbr.rel target = $region3
  $region8: #{osg_decoder_forward.1} parent=0 // loop_exit
    _

</llo_original>
